<compile_context>
chip_gen: v7x
topology: tpu7x:2x2x1
jax: 0.10.0
libtpu: 0.0.40
codegen_flags: <defaults>
</compile_context>

<pallas_src>
import functools

import jax
import jax.numpy as jnp
from jax import lax
from jax.experimental import pallas as pl
from jax.experimental.pallas import tpu as pltpu

LANE = 128


# ----------------------------- Pallas kernel -------------------------------

def _pose_net_kernel(x_ref, wci_ref, wcr_ref, wp_ref, bias_ref, out_ref, acc_ref,
                     *, inv_s):
    # x_ref   : (b_tile, Cimg, s_tile) bf16   native NCHW layout, spatial flattened
    # wci_ref : (Cimg, F_pad) f32             backbone-stub 1x1 conv weight, image half
    # wcr_ref : (Cimg, F_pad) f32             render half (channel flip pre-folded)
    # wp_ref  : (F_pad, P_pad) f32            pose_fc weight (transposed), zero-padded
    # bias_ref: (1, P_pad) f32
    # out_ref : (b_tile, P_pad) f32
    # acc_ref : (b_tile, F_pad) f32 scratch   running spatial feature sum
    si = pl.program_id(1)

    @pl.when(si == 0)
    def _init():
        acc_ref[...] = jnp.zeros_like(acc_ref)

    b_tile, _, s_tile = x_ref.shape
    wci = wci_ref[...]
    wcr = wcr_ref[...]
    ones_row = jnp.ones((1, s_tile), jnp.float32)
    # contraction over channels: h[s, f] = sum_c x[c, s] * w[c, f]
    dn = (((0,), (0,)), ((), ()))

    parts = []
    for bb in range(b_tile):                       # b_tile <= 8, fully unrolled
        x_b = x_ref[bb].astype(jnp.float32)        # (Cimg, s_tile), f32 for VPU/EUP
        xr_b = jnp.tanh(x_b * 0.5)                 # synthetic render stand-in (EUP)
        h = lax.dot_general(x_b, wci, dn, preferred_element_type=jnp.float32)
        h = h + lax.dot_general(xr_b, wcr, dn, preferred_element_type=jnp.float32)
        h = jnp.maximum(h, 0.0)                    # (s_tile, F_pad) "backbone" + ReLU
        # spatial partial sum on the MXU (ones-vector contraction) -> (1, F_pad)
        parts.append(jnp.dot(ones_row, h, preferred_element_type=jnp.float32))
    acc_ref[...] += jnp.concatenate(parts, axis=0)

    @pl.when(si == pl.num_programs(1) - 1)
    def _finalize():
        feat = acc_ref[...] * inv_s                # global average pool (f32)
        out_ref[...] = (
            jnp.dot(feat, wp_ref[...], preferred_element_type=jnp.float32)
            + bias_ref[...]
        ).astype(out_ref.dtype)


# ------------------------------- wrapper ------------------------------------

def _pick_s_tile(s_total):
    # Largest lane-aligned spatial tile that divides S; whole S when it is small.
    # Even the largest candidate keeps the double-buffered x block + f32 temporaries
    # far below v7x's 64 MiB VMEM.
    if s_total <= 2048:
        return s_total
    for cand in (2048, 1024, 512, 256, 128):
        if s_total % cand == 0:
            return cand
    return s_total


def _pick_b_tile(batch):
    if batch <= 8:
        return batch                # block equals the full batch dim
    if batch % 8 == 0:
        return 8                    # sublane-aligned batch tile
    return batch                    # fallback: whole batch per block


def pose_net_forward(images_nchw, wc_img, wc_rnd, wp, bias):
    """Fused render-stub + backbone-stub + global-avg-pool + pose_fc.

    images_nchw: (B, Cimg, H, W).  Weights pre-padded lane-dense by
    prepare_pose_net_params.  Returns (B, P_pad); caller slices [:, :pose_dim].
    """
    B, Cimg, H, W = images_nchw.shape
    S = H * W
    F_pad = wc_img.shape[1]
    P_pad = wp.shape[1]

    # Free reshape (contiguous); bf16 halves HBM traffic for the only large operand.
    # TODO(synk): in the real pipeline the crop/render producer should emit bf16
    # directly so this cast is not an extra HBM pass.
    x = images_nchw.reshape(B, Cimg, S).astype(jnp.bfloat16)

    b_tile = _pick_b_tile(B)
    s_tile = _pick_s_tile(S)
    grid = (B // b_tile, S // s_tile)

    kernel = functools.partial(_pose_net_kernel, inv_s=1.0 / float(S))

    return pl.pallas_call(
        kernel,
        out_shape=jax.ShapeDtypeStruct((B, P_pad), jnp.float32),
        grid_spec=pltpu.PrefetchScalarGridSpec(
            num_scalar_prefetch=0,
            grid=grid,
            in_specs=[
                pl.BlockSpec((b_tile, Cimg, s_tile), lambda b, s: (b, 0, s)),
                pl.BlockSpec((Cimg, F_pad), lambda b, s: (0, 0)),   # weights stay resident
                pl.BlockSpec((Cimg, F_pad), lambda b, s: (0, 0)),
                pl.BlockSpec((F_pad, P_pad), lambda b, s: (0, 0)),
                pl.BlockSpec((1, P_pad), lambda b, s: (0, 0)),
            ],
            out_specs=pl.BlockSpec((b_tile, P_pad), lambda b, s: (b, 0)),
            scratch_shapes=[pltpu.VMEM((b_tile, F_pad), jnp.float32)],
        ),
        compiler_params=pltpu.CompilerParams(
            # batch axis shards across TensorCores (v7x); spatial reduction stays serial.
            dimension_semantics=("parallel", "arbitrary"),
            # Headroom for large S-tiles; safe on v5e (16 MiB default) .. v7x (64 MiB phys).
            vmem_limit_bytes=32 * 1024 * 1024,
        ),
    )(x, wc_img, wc_rnd, wp, bias)


def prepare_pose_net_params(wc_full, wp_t, bias, n_img_channels):
    """Split + pad the stub-backbone / pose_fc parameters for the fused kernel.

    wc_full: (2*Cimg, F)  1x1-conv weight over cat([images, renders], channel dim).
    wp_t   : (F, P)       pose_fc weight, transposed (y = feat @ wp_t + bias).
    bias   : (P,)
    """
    _, f = wc_full.shape
    cimg = n_img_channels
    p = wp_t.shape[1]
    f_pad = ((f + LANE - 1) // LANE) * LANE
    p_pad = ((p + LANE - 1) // LANE) * LANE

    wc_img = wc_full[:cimg]
    # renders = tanh(0.5 * images[:, ::-1]): fold the channel flip into the weight rows
    # instead of flipping data inside the kernel.
    wc_rnd = wc_full[cimg:][::-1]

    # Zero-pad F (relu(0)=0 and matching wp rows are zero -> exact) and P (padded
    # outputs are 0 and sliced off) so every matmul and the output store are lane-dense.
    wc_img = jnp.pad(wc_img, ((0, 0), (0, f_pad - f))).astype(jnp.float32)
    wc_rnd = jnp.pad(wc_rnd, ((0, 0), (0, f_pad - f))).astype(jnp.float32)
    wp_pad = jnp.pad(wp_t, ((0, f_pad - f), (0, p_pad - p))).astype(jnp.float32)
    b_pad = jnp.pad(bias, (0, p_pad - p)).reshape(1, p_pad).astype(jnp.float32)
    return wc_img, wc_rnd, wp_pad, b_pad


# ------------------------- plain-JAX glue (update_pose) --------------------

def _normalize(v, eps=1e-8):
    return v / jnp.sqrt(jnp.maximum(jnp.sum(v * v, axis=-1, keepdims=True), eps))


def compute_rotation_matrix_from_ortho6d(poses6d):
    # poses6d: (B, 6) -> (B, 3, 3), columns are the orthonormalized x, y, z axes
    x_raw = poses6d[:, 0:3]
    y_raw = poses6d[:, 3:6]
    x = _normalize(x_raw)
    z = _normalize(jnp.cross(x, y_raw))
    y = jnp.cross(z, x)
    return jnp.stack([x, y, z], axis=-1)


def apply_imagespace_predictions(TCO, K, vxvyvz, dR):
    # TCO: (B,4,4), K: (B,3,3), vxvyvz: (B,3), dR: (B,3,3)
    R = jnp.einsum('bij,bjk->bik', dR, TCO[:, :3, :3])
    zsrc = TCO[:, 2, 3:4]                      # (B,1)
    vz = vxvyvz[:, 2:3]
    ztgt = vz * zsrc                           # (B,1)
    vxvy = vxvyvz[:, :2]
    fxfy = jnp.stack([K[:, 0, 0], K[:, 1, 1]], axis=-1)
    xsrcysrc = TCO[:, :2, 3]
    txy = (vxvy / fxfy + xsrcysrc / zsrc) * ztgt
    TCO_out = TCO
    TCO_out = TCO_out.at[:, :3, :3].set(R)
    TCO_out = TCO_out.at[:, :2, 3].set(txy)
    TCO_out = TCO_out.at[:, 2, 3].set(ztgt[:, 0])
    return TCO_out


def pose_predictor_forward(images, K, labels, TCO, padded_params, pose_dim=9,
                           n_iterations=1):
    """Mirrors PosePredictor.forward for pose_dim=9."""
    del labels  # only needed by crop_inputs / renderer (see TODO below)
    wc_img, wc_rnd, wp_pad, b_pad = padded_params
    outputs = {}
    TCO_input = TCO
    for n in range(n_iterations):
        # TODO(synk): crop_inputs (mesh_db point sampling, project_points, deepim_crops,
        # K crop/resize) and the differentiable renderer have no clean Pallas equivalent;
        # identity crop + deterministic tanh stand-in render (computed inside the kernel).
        images_crop = images
        K_crop = K

        pose_full = pose_net_forward(images_crop, wc_img, wc_rnd, wp_pad, b_pad)
        pose_out = pose_full[:, :pose_dim]
        dR = compute_rotation_matrix_from_ortho6d(pose_out[:, 0:6])
        vxvyvz = pose_out[:, 6:9]
        TCO_output = apply_imagespace_predictions(TCO_input, K_crop, vxvyvz, dR)

        outputs[f'iteration={n + 1}'] = dict(
            TCO_input=TCO_input, TCO_output=TCO_output, K_crop=K_crop,
            model_outputs={'pose': pose_out})
        TCO_input = TCO_output
    return outputs


# ---------------------- plain-JAX reference (for checking) -----------------

def pose_net_reference(images, wc_full, wp_t, bias):
    """Unfused reference of the same math (same bf16 input quantisation as the kernel)."""
    B, Cimg, H, W = images.shape
    x_img = images.astype(jnp.bfloat16).astype(jnp.float32)
    renders = jnp.tanh(x_img[:, ::-1, :, :] * 0.5)
    x = jnp.concatenate([x_img, renders], axis=1)                 # (B, 2*Cimg, H, W)
    x_cl = jnp.transpose(x, (0, 2, 3, 1)).reshape(B, H * W, 2 * Cimg)
    h = jnp.maximum(jnp.einsum('bsc,cf->bsf', x_cl, wc_full), 0.0)
    feat = jnp.mean(h, axis=1)
    return feat @ wp_t + bias


# --------------------------------- main ------------------------------------

if __name__ == "__main__":
    key = jax.random.PRNGKey(0)
    B, Cimg, H, W = 2, 3, 16, 16
    F = 32          # backbone.n_features (stub)
    P = 9           # pose_dim
    Cin = 2 * Cimg  # images_crop ++ renders along the channel dim

    k1, k2, k3, k4 = jax.random.split(key, 4)
    images = jax.random.normal(k1, (B, Cimg, H, W), jnp.float32)
    K = jnp.tile(jnp.array([[100.0, 0.0, W / 2],
                            [0.0, 100.0, H / 2],
                            [0.0, 0.0, 1.0]], jnp.float32), (B, 1, 1))
    TCO = jnp.tile(jnp.eye(4, dtype=jnp.float32), (B, 1, 1)).at[:, 2, 3].set(1.0)
    labels = ["obj_000001", "obj_000002"]

    # deterministic synthetic parameters (not a checkpoint load)
    wc_full = 0.1 * jax.random.normal(k2, (Cin, F), jnp.float32)  # backbone stub 1x1 conv
    wp_t = 0.1 * jax.random.normal(k3, (F, P), jnp.float32)       # pose_fc weight (W^T)
    bias = 0.01 * jax.random.normal(k4, (P,), jnp.float32)        # pose_fc bias

    params = prepare_pose_net_params(wc_full, wp_t, bias, n_img_channels=Cimg)
    outs = pose_predictor_forward(images, K, labels, TCO, params, pose_dim=P,
                                  n_iterations=1)
    pose = outs['iteration=1']['model_outputs']['pose']
    jax.block_until_ready(outs['iteration=1']['TCO_output'])
    jax.block_until_ready(pose)

    ref = pose_net_reference(images, wc_full, wp_t, bias)
    err = float(jnp.max(jnp.abs(pose - ref)))
    assert err < 3e-2, f"pose head mismatch vs reference: max |err| = {err}"
    print("KERNEL_OK")
</pallas_src>

<mosaic_0001>
module attributes {stable_mosaic.version = 11 : i64} {
  func.func @_pose_net_kernel(%arg0: i32, %arg1: i32, %arg2: memref<2x3x256xbf16, #tpu.memory_space<vmem>>, %arg3: memref<3x128xf32, #tpu.memory_space<vmem>>, %arg4: memref<3x128xf32, #tpu.memory_space<vmem>>, %arg5: memref<128x128xf32, #tpu.memory_space<vmem>>, %arg6: memref<1x128xf32, #tpu.memory_space<vmem>>, %arg7: memref<2x128xf32, #tpu.memory_space<vmem>>, %arg8: memref<2x128xf32, #tpu.memory_space<vmem>>) attributes {dimension_semantics = [#tpu.dimension_semantics<parallel>, #tpu.dimension_semantics<arbitrary>], iteration_bounds = array<i64: 1, 1>, scalar_prefetch = 0 : i64, scratch_operands = 1 : i64, tpu.core_type = #tpu.core_type<tc>, window_params = [{transform_indices = @transform_0, window_bounds = array<i64: 2, 3, 256>}, {pipeline_mode = #tpu.pipeline_mode<synchronous>, transform_indices = @transform_1, window_bounds = array<i64: 3, 128>}, {pipeline_mode = #tpu.pipeline_mode<synchronous>, transform_indices = @transform_2, window_bounds = array<i64: 3, 128>}, {pipeline_mode = #tpu.pipeline_mode<synchronous>, transform_indices = @transform_3, window_bounds = array<i64: 128, 128>}, {pipeline_mode = #tpu.pipeline_mode<synchronous>, transform_indices = @transform_4, window_bounds = array<i64: 1, 128>}, {transform_indices = @transform_5, window_bounds = array<i64: 2, 128>}]} {
    %c0_i32 = arith.constant 0 : i32
    %0 = arith.cmpi eq, %arg1, %c0_i32 : i32
    %1 = arith.extui %0 : i1 to i32
    %c0_i32_0 = arith.constant 0 : i32
    %2 = arith.cmpi ne, %1, %c0_i32_0 : i32
    scf.if %2 {
      %cst_25 = arith.constant 0.000000e+00 : f32
      %37 = vector.broadcast %cst_25 : f32 to vector<2x128xf32>
      %c0_26 = arith.constant 0 : index
      %c0_27 = arith.constant 0 : index
      %38 = vector.load %arg8[%c0_26, %c0_27] : memref<2x128xf32, #tpu.memory_space<vmem>>, vector<2x128xf32>
      tpu.vector_store %arg8[%c0_26, %c0_27], %37 {strides = array<i32>} : memref<2x128xf32, #tpu.memory_space<vmem>>, vector<2x128xf32>,
    } else {
    }
    %c0 = arith.constant 0 : index
    %c0_1 = arith.constant 0 : index
    %3 = vector.load %arg3[%c0, %c0_1] : memref<3x128xf32, #tpu.memory_space<vmem>>, vector<3x128xf32>
    %c0_2 = arith.constant 0 : index
    %c0_3 = arith.constant 0 : index
    %4 = vector.load %arg4[%c0_2, %c0_3] : memref<3x128xf32, #tpu.memory_space<vmem>>, vector<3x128xf32>
    %cst = arith.constant 1.000000e+00 : f32
    %5 = vector.broadcast %cst : f32 to vector<1x256xf32>
    %c0_4 = arith.constant 0 : index
    %c0_5 = arith.constant 0 : index
    %c0_6 = arith.constant 0 : index
    %6 = vector.load %arg2[%c0_4, %c0_5, %c0_6] : memref<2x3x256xbf16, #tpu.memory_space<vmem>>, vector<1x3x256xbf16>
    %7 = vector.shape_cast %6 : vector<1x3x256xbf16> to vector<3x256xbf16>
    %8 = arith.extf %7 : vector<3x256xbf16> to vector<3x256xf32>
    %cst_7 = arith.constant 5.000000e-01 : f32
    %9 = vector.broadcast %cst_7 : f32 to vector<3x256xf32>
    %10 = arith.mulf %8, %9 : vector<3x256xf32>
    %11 = math.tanh %10 : vector<3x256xf32>
    %cst_8 = arith.constant dense<0.000000e+00> : vector<256x128xf32>
    %12 = tpu.matmul %8, %3, %cst_8 {dimension_numbers = #tpu.dot_dimension_numbers<[0], [0], [1], [1], [0, 1, 1, 1], [], []>} : vector<3x256xf32>, vector<3x128xf32>, vector<256x128xf32> -> vector<256x128xf32>
    %cst_9 = arith.constant dense<0.000000e+00> : vector<256x128xf32>
    %13 = tpu.matmul %11, %4, %cst_9 {dimension_numbers = #tpu.dot_dimension_numbers<[0], [0], [1], [1], [0, 1, 1, 1], [], []>} : vector<3x256xf32>, vector<3x128xf32>, vector<256x128xf32> -> vector<256x128xf32>
    %14 = arith.addf %12, %13 : vector<256x128xf32>
    %cst_10 = arith.constant 0.000000e+00 : f32
    %15 = vector.broadcast %cst_10 : f32 to vector<256x128xf32>
    %16 = arith.maximumf %14, %15 : vector<256x128xf32>
    %cst_11 = arith.constant dense<0.000000e+00> : vector<1x128xf32>
    %17 = tpu.matmul %5, %16, %cst_11 {dimension_numbers = #tpu.dot_dimension_numbers<[1], [0], [0], [1], [0, 0, 1, 1], [], []>} : vector<1x256xf32>, vector<256x128xf32>, vector<1x128xf32> -> vector<1x128xf32>
    %c1 = arith.constant 1 : index
    %c0_12 = arith.constant 0 : index
    %c0_13 = arith.constant 0 : index
    %18 = vector.load %arg2[%c1, %c0_12, %c0_13] : memref<2x3x256xbf16, #tpu.memory_space<vmem>>, vector<1x3x256xbf16>
    %19 = vector.shape_cast %18 : vector<1x3x256xbf16> to vector<3x256xbf16>
    %20 = arith.extf %19 : vector<3x256xbf16> to vector<3x256xf32>
    %cst_14 = arith.constant 5.000000e-01 : f32
    %21 = vector.broadcast %cst_14 : f32 to vector<3x256xf32>
    %22 = arith.mulf %20, %21 : vector<3x256xf32>
    %23 = math.tanh %22 : vector<3x256xf32>
    %cst_15 = arith.constant dense<0.000000e+00> : vector<256x128xf32>
    %24 = tpu.matmul %20, %3, %cst_15 {dimension_numbers = #tpu.dot_dimension_numbers<[0], [0], [1], [1], [0, 1, 1, 1], [], []>} : vector<3x256xf32>, vector<3x128xf32>, vector<256x128xf32> -> vector<256x128xf32>
    %cst_16 = arith.constant dense<0.000000e+00> : vector<256x128xf32>
    %25 = tpu.matmul %23, %4, %cst_16 {dimension_numbers = #tpu.dot_dimension_numbers<[0], [0], [1], [1], [0, 1, 1, 1], [], []>} : vector<3x256xf32>, vector<3x128xf32>, vector<256x128xf32> -> vector<256x128xf32>
    %26 = arith.addf %24, %25 : vector<256x128xf32>
    %cst_17 = arith.constant 0.000000e+00 : f32
    %27 = vector.broadcast %cst_17 : f32 to vector<256x128xf32>
    %28 = arith.maximumf %26, %27 : vector<256x128xf32>
    %cst_18 = arith.constant dense<0.000000e+00> : vector<1x128xf32>
    %29 = tpu.matmul %5, %28, %cst_18 {dimension_numbers = #tpu.dot_dimension_numbers<[1], [0], [0], [1], [0, 0, 1, 1], [], []>} : vector<1x256xf32>, vector<256x128xf32>, vector<1x128xf32> -> vector<1x128xf32>
    %c0_19 = arith.constant 0 : index
    %c0_20 = arith.constant 0 : index
    %30 = vector.load %arg8[%c0_19, %c0_20] : memref<2x128xf32, #tpu.memory_space<vmem>>, vector<2x128xf32>
    %31 = tpu.concatenate %17, %29 in 0 : vector<1x128xf32>, vector<1x128xf32> -> vector<2x128xf32>
    %32 = arith.addf %30, %31 : vector<2x128xf32>
    %c0_21 = arith.constant 0 : index
    %c0_22 = arith.constant 0 : index
    %33 = vector.load %arg8[%c0_21, %c0_22] : memref<2x128xf32, #tpu.memory_space<vmem>>, vector<2x128xf32>
    tpu.vector_store %arg8[%c0_21, %c0_22], %32 {strides = array<i32>} : memref<2x128xf32, #tpu.memory_space<vmem>>, vector<2x128xf32>,
    %c0_i32_23 = arith.constant 0 : i32
    %34 = arith.cmpi eq, %arg1, %c0_i32_23 : i32
    %35 = arith.extui %34 : i1 to i32
    %c0_i32_24 = arith.constant 0 : i32
    %36 = arith.cmpi ne, %35, %c0_i32_24 : i32
    scf.if %36 {
      %c0_25 = arith.constant 0 : index
      %c0_26 = arith.constant 0 : index
      %37 = vector.load %arg8[%c0_25, %c0_26] : memref<2x128xf32, #tpu.memory_space<vmem>>, vector<2x128xf32>
      %cst_27 = arith.constant 3.906250e-03 : f32
      %38 = vector.broadcast %cst_27 : f32 to vector<2x128xf32>
      %39 = arith.mulf %37, %38 : vector<2x128xf32>
      %c0_28 = arith.constant 0 : index
      %c0_29 = arith.constant 0 : index
      %40 = vector.load %arg5[%c0_28, %c0_29] : memref<128x128xf32, #tpu.memory_space<vmem>>, vector<128x128xf32>
      %cst_30 = arith.constant dense<0.000000e+00> : vector<2x128xf32>
      %41 = tpu.matmul %39, %40, %cst_30 {dimension_numbers = #tpu.dot_dimension_numbers<[1], [0], [0], [1], [0, 0, 1, 1], [], []>} : vector<2x128xf32>, vector<128x128xf32>, vector<2x128xf32> -> vector<2x128xf32>
      %c0_31 = arith.constant 0 : index
      %c0_32 = arith.constant 0 : index
      %42 = vector.load %arg6[%c0_31, %c0_32] : memref<1x128xf32, #tpu.memory_space<vmem>>, vector<1x128xf32>
      %43 = vector.broadcast %42 : vector<1x128xf32> to vector<2x128xf32>
      %44 = arith.addf %41, %43 : vector<2x128xf32>
      %c0_33 = arith.constant 0 : index
      %c0_34 = arith.constant 0 : index
      %45 = vector.load %arg7[%c0_33, %c0_34] : memref<2x128xf32, #tpu.memory_space<vmem>>, vector<2x128xf32>
      tpu.vector_store %arg7[%c0_33, %c0_34], %44 {strides = array<i32>} : memref<2x128xf32, #tpu.memory_space<vmem>>, vector<2x128xf32>,
    } else {
    }
    return
  }
  func.func @transform_0(%arg0: i32, %arg1: i32) -> (i32, i32, i32) {
    %c0_i32 = arith.constant 0 : i32
    %c0_i32_0 = arith.constant 0 : i32
    return %arg0, %c0_i32, %arg1 : i32, i32, i32
  }
  func.func @transform_1(%arg0: i32, %arg1: i32) -> (i32, i32) {
    %c0_i32 = arith.constant 0 : i32
    %c0_i32_0 = arith.constant 0 : i32
    %c0_i32_1 = arith.constant 0 : i32
    return %c0_i32, %c0_i32_0 : i32, i32
  }
  func.func @transform_2(%arg0: i32, %arg1: i32) -> (i32, i32) {
    %c0_i32 = arith.constant 0 : i32
    %c0_i32_0 = arith.constant 0 : i32
    %c0_i32_1 = arith.constant 0 : i32
    return %c0_i32, %c0_i32_0 : i32, i32
  }
  func.func @transform_3(%arg0: i32, %arg1: i32) -> (i32, i32) {
    %c0_i32 = arith.constant 0 : i32
    %c0_i32_0 = arith.constant 0 : i32
    %c0_i32_1 = arith.constant 0 : i32
    return %c0_i32, %c0_i32_0 : i32, i32
  }
  func.func @transform_4(%arg0: i32, %arg1: i32) -> (i32, i32) {
    %c0_i32 = arith.constant 0 : i32
    %c0_i32_0 = arith.constant 0 : i32
    %c0_i32_1 = arith.constant 0 : i32
    return %c0_i32, %c0_i32_0 : i32, i32
  }
  func.func @transform_5(%arg0: i32, %arg1: i32) -> (i32, i32) {
    %c0_i32 = arith.constant 0 : i32
    %c0_i32_0 = arith.constant 0 : i32
    return %arg0, %c0_i32 : i32, i32
  }
}

</mosaic_0001>

<llo_original>
// kernel: tpu_custom_call.1
$region0: #{tpu_custom_call.1}
  #allocation0 [shape = 'u32[]', space=smem, size = 0x4, offset = 0x4, fixed_abs, tag = 'smem constant byte address 0x4 - core index']
  #allocation1 [shape = 'u32[144,128]{1,0:T(1,128)}', space=vmem, size = 0x12000, scoped, tag = 'internal scratch']
  #allocation2 [shape = 'f32[2,128]{1,0:T(2,128)}', space=vmem, size = 0x400, scoped, tag = 'scratch operand']
  %s0 = inlined_call_operand.vmem [shape: bf16[2,3,256], index: 0, kind: input, shape index: {}]
  %s1 = inlined_call_operand.vmem [shape: f32[3,128], index: 1, kind: input, shape index: {}]
  %s2 = inlined_call_operand.vmem [shape: f32[3,128], index: 2, kind: input, shape index: {}]
  %s3 = inlined_call_operand.hbm [shape: f32[128,128], index: 3, kind: input, shape index: {}]
  %s4 = inlined_call_operand.vmem [shape: f32[1,128], index: 4, kind: input, shape index: {}]
  %s5 = inlined_call_operand.hbm [shape: f32[2,128], index: 5, kind: output, shape index: {}]
  %s6 = sld [smem:[#allocation0]]
  $region42: #{tpu_custom_call.1} parent=0
    _
  %s8 = ssub.s32 1, %s6
  %s9 = scalar_select 0, %s8, %s6
  $region1: #{tpu_custom_call.1} parent=0
    #allocation3 [shape = 'u8[65536]{0}', space=vmem, size = 0x10000, scoped, tag = 'input window, operand 3, single buffered']
    #allocation4 [shape = 's32[1]{0}', space=sflag, size = 0x4, scoped, tag = 'scoped memory for tpu_custom_call.1']
    #allocation5 [shape = 's32[1]{0}', space=sflag, size = 0x4, scoped, tag = 'scoped memory for tpu_custom_call.1']
    #allocation6 [shape = 'u8[1024]{0}', space=vmem, size = 0x400, scoped, tag = 'output window, operand 0, single buffered']
    %10 = vsyncpa [#allocation4], 0
    %11 = vsyncpa [#allocation5], 0
    // Predicated region
    $region2: #{tpu_custom_call.1} parent=1 // pred_check
      _
    $region3: #{tpu_custom_call.1} parent=1 // pred_check_branch
      %13 = sbr.rel (0) target = $region5
    $region4: #{tpu_custom_call.1} parent=1 // pred_region
      _
    $region5: #{tpu_custom_call.1} parent=1 // pred_fallthru
      _
    // Predicated region
    $region6: #{tpu_custom_call.1} parent=1 // pred_check
      _
    $region7: #{tpu_custom_call.1} parent=1 // pred_check_branch
      %15 = sbr.rel (0) target = $region9
    $region8: #{tpu_custom_call.1} parent=1 // pred_region
      _
    $region9: #{tpu_custom_call.1} parent=1 // pred_fallthru
      _
    // Predicated region
    $region10: #{tpu_custom_call.1} parent=1 // pred_check
      _
    $region11: #{tpu_custom_call.1} parent=1 // pred_check_branch
      %17 = sbr.rel (0) target = $region13
    $region12: #{tpu_custom_call.1} parent=1 // pred_region
      _
    $region13: #{tpu_custom_call.1} parent=1 // pred_fallthru
      _
    // Predicated region
    $region14: #{tpu_custom_call.1} parent=1 // pred_check
      _
    $region15: #{tpu_custom_call.1} parent=1 // pred_check_branch
      %19 = sbr.rel (0) target = $region17
    $region16: #{tpu_custom_call.1} parent=1 // pred_region
      %s21 = ssub.s32 2048, 2048
      %22 = vsyncadd [#allocation4], %s21
      %s23 = sshll.u32 [#allocation3], 4
      %s24 = int_to_ptr.vmem [resolvable:$true] %s23
      %29 = dma.hbm_to_vmem [thread:$0]  %s3, 2048, %s24, [#allocation4], 128, 128, 8
    $region17: #{tpu_custom_call.1} parent=1 // pred_fallthru
      _
    // Predicated region
    $region18: #{tpu_custom_call.1} parent=1 // pred_check
      _
    $region19: #{tpu_custom_call.1} parent=1 // pred_check_branch
      %31 = sbr.rel (0) target = $region21
    $region20: #{tpu_custom_call.1} parent=1 // pred_region
      _
    $region21: #{tpu_custom_call.1} parent=1 // pred_fallthru
      _
    // Predicated region
    $region22: #{tpu_custom_call.1} parent=1 // pred_check
      _
    $region23: #{tpu_custom_call.1} parent=1 // pred_check_branch
      %33 = sbr.rel (0) target = $region25
    $region24: #{tpu_custom_call.1} parent=1 // pred_region
      %34 = dma.done [#allocation4], 2048
    $region25: #{tpu_custom_call.1} parent=1 // pred_fallthru
      _
    %p35 = scmp.eq.s32.totalorder 0, 0
    // Predicated region
    $region26: #{tpu_custom_call.1} parent=1 // pred_check
      %p36 = pneg %p35
    $region27: #{tpu_custom_call.1} parent=1 // pred_check_branch
      %38 = sbr.rel (%p36) target = $region29
    $region28: #{tpu_custom_call.1} parent=1 // pred_region
      %39 = vst [vmem:[#allocation2] sm:$0x3] 0.0
    $region29: #{tpu_custom_call.1} parent=1 // pred_fallthru
      _
    %v40 = vld [vmem:[%s1] sm:$0x7]
    %v41 = vld [vmem:[%s2] sm:$0x7]
    %v42 = vld [vmem:[%s0] sm:$0xf]
    %v43 = vunpack.c.l.bf16 %v42
    %v44 = vmul.f32 %v43, 0.5
    %v45 = vtanh.pop %v44
    %v47 = vcombine.high %v45, %v45
    %49 = vxpose.xlu0.b32.start [1/16] %v45, 128
    %50 = vxpose.xlu0.b32.cont [2/16] 0.0, 128
    %51 = vxpose.xlu0.b32.cont [3/16] 0.0, 128
    %52 = vxpose.xlu0.b32.cont [4/16] 0.0, 128
    %53 = vxpose.xlu0.b32.cont [5/16] 0.0, 128
    %54 = vxpose.xlu0.b32.cont [6/16] 0.0, 128
    %55 = vxpose.xlu0.b32.cont [7/16] 0.0, 128
    %56 = vxpose.xlu0.b32.cont [8/16] 0.0, 128
    %57 = vxpose.xlu0.b32.cont [9/16] 0.0, 128
    %58 = vxpose.xlu0.b32.cont [10/16] 0.0, 128
    %59 = vxpose.xlu0.b32.cont [11/16] 0.0, 128
    %60 = vxpose.xlu0.b32.cont [12/16] 0.0, 128
    %61 = vxpose.xlu0.b32.cont [13/16] 0.0, 128
    %62 = vxpose.xlu0.b32.cont [14/16] 0.0, 128
    %63 = vxpose.xlu0.b32.cont [15/16] 0.0, 128
    %64 = vxpose.xlu0.b32.end [16/16] 0.0, 128
    %v65 = vpop.trf.xlu0
    %v66 = vpop.trf.xlu0
    %v67 = vpop.trf.xlu0
    %v68 = vpop.trf.xlu0
    %v69 = vpop.trf.xlu0
    %v70 = vpop.trf.xlu0
    %v71 = vpop.trf.xlu0
    %v72 = vpop.trf.xlu0
    %v73 = vpop.trf.xlu0
    %v74 = vpop.trf.xlu0
    %v75 = vpop.trf.xlu0
    %v76 = vpop.trf.xlu0
    %v77 = vpop.trf.xlu0
    %v78 = vpop.trf.xlu0
    %v79 = vpop.trf.xlu0
    %v80 = vpop.trf.xlu0
    %81 = vxpose.xlu0.b32.start [1/16] %v47, 128
    %82 = vxpose.xlu0.b32.cont [2/16] 0.0, 128
    %83 = vxpose.xlu0.b32.cont [3/16] 0.0, 128
    %84 = vxpose.xlu0.b32.cont [4/16] 0.0, 128
    %85 = vxpose.xlu0.b32.cont [5/16] 0.0, 128
    %86 = vxpose.xlu0.b32.cont [6/16] 0.0, 128
    %87 = vxpose.xlu0.b32.cont [7/16] 0.0, 128
    %88 = vxpose.xlu0.b32.cont [8/16] 0.0, 128
    %89 = vxpose.xlu0.b32.cont [9/16] 0.0, 128
    %90 = vxpose.xlu0.b32.cont [10/16] 0.0, 128
    %91 = vxpose.xlu0.b32.cont [11/16] 0.0, 128
    %92 = vxpose.xlu0.b32.cont [12/16] 0.0, 128
    %93 = vxpose.xlu0.b32.cont [13/16] 0.0, 128
    %94 = vxpose.xlu0.b32.cont [14/16] 0.0, 128
    %95 = vxpose.xlu0.b32.cont [15/16] 0.0, 128
    %96 = vxpose.xlu0.b32.end [16/16] 0.0, 128
    %v97 = vpop.trf.xlu0
    %v98 = vpop.trf.xlu0
    %v99 = vpop.trf.xlu0
    %v100 = vpop.trf.xlu0
    %v101 = vpop.trf.xlu0
    %v102 = vpop.trf.xlu0
    %v103 = vpop.trf.xlu0
    %v104 = vpop.trf.xlu0
    %v105 = vpop.trf.xlu0
    %v106 = vpop.trf.xlu0
    %v107 = vpop.trf.xlu0
    %v108 = vpop.trf.xlu0
    %v109 = vpop.trf.xlu0
    %v110 = vpop.trf.xlu0
    %v111 = vpop.trf.xlu0
    %v112 = vpop.trf.xlu0
    %vm113 = vcmask 23552
    %v115 = vsel %vm113, %v65, 0
    %v118 = vsel %vm113, %v66, 0
    %v121 = vsel %vm113, %v67, 0
    %v124 = vsel %vm113, %v68, 0
    %v127 = vsel %vm113, %v69, 0
    %v130 = vsel %vm113, %v70, 0
    %v133 = vsel %vm113, %v71, 0
    %v136 = vsel %vm113, %v72, 0
    %v139 = vsel %vm113, %v73, 0
    %v142 = vsel %vm113, %v74, 0
    %v145 = vsel %vm113, %v75, 0
    %v148 = vsel %vm113, %v76, 0
    %v151 = vsel %vm113, %v77, 0
    %v154 = vsel %vm113, %v78, 0
    %v157 = vsel %vm113, %v79, 0
    %v160 = vsel %vm113, %v80, 0
    %v163 = vsel %vm113, %v97, 0
    %v166 = vsel %vm113, %v98, 0
    %v169 = vsel %vm113, %v99, 0
    %v172 = vsel %vm113, %v100, 0
    %v175 = vsel %vm113, %v101, 0
    %v178 = vsel %vm113, %v102, 0
    %v181 = vsel %vm113, %v103, 0
    %v184 = vsel %vm113, %v104, 0
    %v187 = vsel %vm113, %v105, 0
    %v190 = vsel %vm113, %v106, 0
    %v193 = vsel %vm113, %v107, 0
    %v196 = vsel %vm113, %v108, 0
    %v199 = vsel %vm113, %v109, 0
    %v202 = vsel %vm113, %v110, 0
    %v205 = vsel %vm113, %v111, 0
    %v208 = vsel %vm113, %v112, 0
    %vm210 = vcmask 1042432
    %v212 = vsel %vm210, %v41, 0
    %214 = vmatprep.subr.mxu0 0.0
    %215 = vmatpush1.msra.mxu0 %v212
    %216 = vmatprep.subr.mxu0 0.0
    %217 = vmatpush1.msra.mxu0 0.0
    %218 = vmatprep.subr.mxu0 0.0
    %219 = vmatpush1.msra.mxu0 0.0
    %220 = vmatprep.subr.mxu0 0.0
    %221 = vmatpush1.msra.mxu0 0.0
    %222 = vmatprep.subr.mxu0 0.0
    %223 = vmatpush1.msra.mxu0 0.0
    %224 = vmatprep.subr.mxu0 0.0
    %225 = vmatpush1.msra.mxu0 0.0
    %226 = vmatprep.subr.mxu0 0.0
    %227 = vmatpush1.msra.mxu0 0.0
    %228 = vmatprep.subr.mxu0 0.0
    %229 = vmatpush1.msra.mxu0 0.0
    %230 = vmatprep.subr.mxu0 0.0
    %231 = vmatpush1.msra.mxu0 0.0
    %232 = vmatprep.subr.mxu0 0.0
    %233 = vmatpush1.msra.mxu0 0.0
    %234 = vmatprep.subr.mxu0 0.0
    %235 = vmatpush1.msra.mxu0 0.0
    %236 = vmatprep.subr.mxu0 0.0
    %237 = vmatpush1.msra.mxu0 0.0
    %238 = vmatprep.subr.mxu0 0.0
    %239 = vmatpush1.msra.mxu0 0.0
    %240 = vmatprep.subr.mxu0 0.0
    %241 = vmatpush1.msra.mxu0 0.0
    %242 = vmatprep.subr.mxu0 0.0
    %243 = vmatpush1.msra.mxu0 0.0
    %244 = vmatprep.subr.mxu0 0.0
    %245 = vmatpush1.msra.mxu0 0.0
    %246 = vmatprep.subr.mxu0 0.0
    %247 = vmatpush1.msra.mxu0 0.0
    %248 = vmatprep.subr.mxu0 0.0
    %249 = vmatpush1.msra.mxu0 0.0
    %250 = vmatprep.subr.mxu0 0.0
    %251 = vmatpush1.msra.mxu0 0.0
    %252 = vmatprep.subr.mxu0 0.0
    %253 = vmatpush1.msra.mxu0 0.0
    %254 = vmatprep.subr.mxu0 0.0
    %255 = vmatpush1.msra.mxu0 0.0
    %256 = vmatprep.subr.mxu0 0.0
    %257 = vmatpush1.msra.mxu0 0.0
    %258 = vmatprep.subr.mxu0 0.0
    %259 = vmatpush1.msra.mxu0 0.0
    %260 = vmatprep.subr.mxu0 0.0
    %261 = vmatpush1.msra.mxu0 0.0
    %262 = vmatprep.subr.mxu0 0.0
    %263 = vmatpush1.msra.mxu0 0.0
    %264 = vmatprep.subr.mxu0 0.0
    %265 = vmatpush1.msra.mxu0 0.0
    %266 = vmatprep.subr.mxu0 0.0
    %267 = vmatpush1.msra.mxu0 0.0
    %268 = vmatprep.subr.mxu0 0.0
    %269 = vmatpush1.msra.mxu0 0.0
    %270 = vmatprep.subr.mxu0 0.0
    %271 = vmatpush1.msra.mxu0 0.0
    %272 = vmatprep.subr.mxu0 0.0
    %273 = vmatpush1.msra.mxu0 0.0
    %274 = vmatprep.subr.mxu0 0.0
    %275 = vmatpush1.msra.mxu0 0.0
    %276 = vmatprep.subr.mxu0 0.0
    %277 = vmatpush1.msra.mxu0 0.0
    %278 = vmatprep.mubr.f32.mxu0 0.0
    %279 = vmatmul.mubr.f32.gmra.mrb[0].mxu0 %v115
    %v280 = vpop.f32.mrb[0].mxu0
    %v281 = vadd.f32 0.0, %v280
    %v282 = vpop.f32.mrb[0].mxu0
    %283 = vmatprep.mubr.f32.mxu0 0.0
    %284 = vmatmul.mubr.f32.gmra.mrb[0].mxu0 %v118
    %v285 = vpop.f32.mrb[0].mxu0
    %v286 = vadd.f32 0.0, %v285
    %v287 = vpop.f32.mrb[0].mxu0
    %288 = vmatprep.mubr.f32.mxu0 0.0
    %289 = vmatmul.mubr.f32.gmra.mrb[0].mxu0 %v121
    %v290 = vpop.f32.mrb[0].mxu0
    %v291 = vadd.f32 0.0, %v290
    %v292 = vpop.f32.mrb[0].mxu0
    %293 = vmatprep.mubr.f32.mxu0 0.0
    %294 = vmatmul.mubr.f32.gmra.mrb[0].mxu0 %v124
    %v295 = vpop.f32.mrb[0].mxu0
    %v296 = vadd.f32 0.0, %v295
    %v297 = vpop.f32.mrb[0].mxu0
    %298 = vmatprep.mubr.f32.mxu0 0.0
    %299 = vmatmul.mubr.f32.gmra.mrb[0].mxu0 %v127
    %v300 = vpop.f32.mrb[0].mxu0
    %v301 = vadd.f32 0.0, %v300
    %v302 = vpop.f32.mrb[0].mxu0
    %303 = vmatprep.mubr.f32.mxu0 0.0
    %304 = vmatmul.mubr.f32.gmra.mrb[0].mxu0 %v130
    %v305 = vpop.f32.mrb[0].mxu0
    %v306 = vadd.f32 0.0, %v305
    %v307 = vpop.f32.mrb[0].mxu0
    %308 = vmatprep.mubr.f32.mxu0 0.0
    %309 = vmatmul.mubr.f32.gmra.mrb[0].mxu0 %v133
    %v310 = vpop.f32.mrb[0].mxu0
    %v311 = vadd.f32 0.0, %v310
    %v312 = vpop.f32.mrb[0].mxu0
    %313 = vmatprep.mubr.f32.mxu0 0.0
    %314 = vmatmul.mubr.f32.gmra.mrb[0].mxu0 %v136
    %v315 = vpop.f32.mrb[0].mxu0
    %v316 = vadd.f32 0.0, %v315
    %v317 = vpop.f32.mrb[0].mxu0
    %318 = vmatprep.mubr.f32.mxu0 0.0
    %319 = vmatmul.mubr.f32.gmra.mrb[0].mxu0 %v139
    %v320 = vpop.f32.mrb[0].mxu0
    %v321 = vadd.f32 0.0, %v320
    %v322 = vpop.f32.mrb[0].mxu0
    %323 = vmatprep.mubr.f32.mxu0 0.0
    %324 = vmatmul.mubr.f32.gmra.mrb[0].mxu0 %v142
    %v325 = vpop.f32.mrb[0].mxu0
    %v326 = vadd.f32 0.0, %v325
    %v327 = vpop.f32.mrb[0].mxu0
    %328 = vmatprep.mubr.f32.mxu0 0.0
    %329 = vmatmul.mubr.f32.gmra.mrb[0].mxu0 %v145
    %v330 = vpop.f32.mrb[0].mxu0
    %v331 = vadd.f32 0.0, %v330
    %v332 = vpop.f32.mrb[0].mxu0
    %333 = vmatprep.mubr.f32.mxu0 0.0
    %334 = vmatmul.mubr.f32.gmra.mrb[0].mxu0 %v148
    %v335 = vpop.f32.mrb[0].mxu0
    %v336 = vadd.f32 0.0, %v335
    %v337 = vpop.f32.mrb[0].mxu0
    %338 = vmatprep.mubr.f32.mxu0 0.0
    %339 = vmatmul.mubr.f32.gmra.mrb[0].mxu0 %v151
    %v340 = vpop.f32.mrb[0].mxu0
    %v341 = vadd.f32 0.0, %v340
    %v342 = vpop.f32.mrb[0].mxu0
    %343 = vmatprep.mubr.f32.mxu0 0.0
    %344 = vmatmul.mubr.f32.gmra.mrb[0].mxu0 %v154
    %v345 = vpop.f32.mrb[0].mxu0
    %v346 = vadd.f32 0.0, %v345
    %v347 = vpop.f32.mrb[0].mxu0
    %348 = vmatprep.mubr.f32.mxu0 0.0
    %349 = vmatmul.mubr.f32.gmra.mrb[0].mxu0 %v157
    %v350 = vpop.f32.mrb[0].mxu0
    %v351 = vadd.f32 0.0, %v350
    %v352 = vpop.f32.mrb[0].mxu0
    %353 = vmatprep.mubr.f32.mxu0 0.0
    %354 = vmatmul.mubr.f32.gmra.mrb[0].mxu0 %v160
    %v355 = vpop.f32.mrb[0].mxu0
    %v356 = vadd.f32 0.0, %v355
    %v357 = vpop.f32.mrb[0].mxu0
    %358 = vmatprep.mubr.f32.mxu0 0.0
    %359 = vmatmul.mubr.f32.gmra.mrb[0].mxu0 %v163
    %v360 = vpop.f32.mrb[0].mxu0
    %v361 = vadd.f32 0.0, %v360
    %v362 = vpop.f32.mrb[0].mxu0
    %363 = vmatprep.mubr.f32.mxu0 0.0
    %364 = vmatmul.mubr.f32.gmra.mrb[0].mxu0 %v166
    %v365 = vpop.f32.mrb[0].mxu0
    %v366 = vadd.f32 0.0, %v365
    %v367 = vpop.f32.mrb[0].mxu0
    %368 = vmatprep.mubr.f32.mxu0 0.0
    %369 = vmatmul.mubr.f32.gmra.mrb[0].mxu0 %v169
    %v370 = vpop.f32.mrb[0].mxu0
    %v371 = vadd.f32 0.0, %v370
    %v372 = vpop.f32.mrb[0].mxu0
    %373 = vmatprep.mubr.f32.mxu0 0.0
    %374 = vmatmul.mubr.f32.gmra.mrb[0].mxu0 %v172
    %v375 = vpop.f32.mrb[0].mxu0
    %v376 = vadd.f32 0.0, %v375
    %v377 = vpop.f32.mrb[0].mxu0
    %378 = vmatprep.mubr.f32.mxu0 0.0
    %379 = vmatmul.mubr.f32.gmra.mrb[0].mxu0 %v175
    %v380 = vpop.f32.mrb[0].mxu0
    %v381 = vadd.f32 0.0, %v380
    %v382 = vpop.f32.mrb[0].mxu0
    %383 = vmatprep.mubr.f32.mxu0 0.0
    %384 = vmatmul.mubr.f32.gmra.mrb[0].mxu0 %v178
    %v385 = vpop.f32.mrb[0].mxu0
    %v386 = vadd.f32 0.0, %v385
    %v387 = vpop.f32.mrb[0].mxu0
    %388 = vmatprep.mubr.f32.mxu0 0.0
    %389 = vmatmul.mubr.f32.gmra.mrb[0].mxu0 %v181
    %v390 = vpop.f32.mrb[0].mxu0
    %v391 = vadd.f32 0.0, %v390
    %v392 = vpop.f32.mrb[0].mxu0
    %393 = vmatprep.mubr.f32.mxu0 0.0
    %394 = vmatmul.mubr.f32.gmra.mrb[0].mxu0 %v184
    %v395 = vpop.f32.mrb[0].mxu0
    %v396 = vadd.f32 0.0, %v395
    %v397 = vpop.f32.mrb[0].mxu0
    %398 = vmatprep.mubr.f32.mxu0 0.0
    %399 = vmatmul.mubr.f32.gmra.mrb[0].mxu0 %v187
    %v400 = vpop.f32.mrb[0].mxu0
    %v401 = vadd.f32 0.0, %v400
    %v402 = vpop.f32.mrb[0].mxu0
    %403 = vmatprep.mubr.f32.mxu0 0.0
    %404 = vmatmul.mubr.f32.gmra.mrb[0].mxu0 %v190
    %v405 = vpop.f32.mrb[0].mxu0
    %v406 = vadd.f32 0.0, %v405
    %v407 = vpop.f32.mrb[0].mxu0
    %408 = vmatprep.mubr.f32.mxu0 0.0
    %409 = vmatmul.mubr.f32.gmra.mrb[0].mxu0 %v193
    %v410 = vpop.f32.mrb[0].mxu0
    %v411 = vadd.f32 0.0, %v410
    %v412 = vpop.f32.mrb[0].mxu0
    %413 = vmatprep.mubr.f32.mxu0 0.0
    %414 = vmatmul.mubr.f32.gmra.mrb[0].mxu0 %v196
    %v415 = vpop.f32.mrb[0].mxu0
    %v416 = vadd.f32 0.0, %v415
    %v417 = vpop.f32.mrb[0].mxu0
    %418 = vmatprep.mubr.f32.mxu0 0.0
    %419 = vmatmul.mubr.f32.gmra.mrb[0].mxu0 %v199
    %v420 = vpop.f32.mrb[0].mxu0
    %v421 = vadd.f32 0.0, %v420
    %v422 = vpop.f32.mrb[0].mxu0
    %423 = vmatprep.mubr.f32.mxu0 0.0
    %424 = vmatmul.mubr.f32.gmra.mrb[0].mxu0 %v202
    %v425 = vpop.f32.mrb[0].mxu0
    %v426 = vadd.f32 0.0, %v425
    %v427 = vpop.f32.mrb[0].mxu0
    %428 = vmatprep.mubr.f32.mxu0 0.0
    %429 = vmatmul.mubr.f32.gmra.mrb[0].mxu0 %v205
    %v430 = vpop.f32.mrb[0].mxu0
    %v431 = vadd.f32 0.0, %v430
    %v432 = vpop.f32.mrb[0].mxu0
    %433 = vmatprep.mubr.f32.mxu0 0.0
    %434 = vmatmul.mubr.f32.gmra.mrb[0].mxu0 %v208
    %v435 = vpop.f32.mrb[0].mxu0
    %v436 = vadd.f32 0.0, %v435
    %v437 = vpop.f32.mrb[0].mxu0
    %438 = vdwg.mxu0
    %v440 = vcombine.high %v43, %v43
    %442 = vxpose.xlu0.b32.start [1/16] %v43, 128
    %443 = vxpose.xlu0.b32.cont [2/16] 0.0, 128
    %444 = vxpose.xlu0.b32.cont [3/16] 0.0, 128
    %445 = vxpose.xlu0.b32.cont [4/16] 0.0, 128
    %446 = vxpose.xlu0.b32.cont [5/16] 0.0, 128
    %447 = vxpose.xlu0.b32.cont [6/16] 0.0, 128
    %448 = vxpose.xlu0.b32.cont [7/16] 0.0, 128
    %449 = vxpose.xlu0.b32.cont [8/16] 0.0, 128
    %450 = vxpose.xlu0.b32.cont [9/16] 0.0, 128
    %451 = vxpose.xlu0.b32.cont [10/16] 0.0, 128
    %452 = vxpose.xlu0.b32.cont [11/16] 0.0, 128
    %453 = vxpose.xlu0.b32.cont [12/16] 0.0, 128
    %454 = vxpose.xlu0.b32.cont [13/16] 0.0, 128
    %455 = vxpose.xlu0.b32.cont [14/16] 0.0, 128
    %456 = vxpose.xlu0.b32.cont [15/16] 0.0, 128
    %457 = vxpose.xlu0.b32.end [16/16] 0.0, 128
    %v458 = vpop.trf.xlu0
    %v459 = vpop.trf.xlu0
    %v460 = vpop.trf.xlu0
    %v461 = vpop.trf.xlu0
    %v462 = vpop.trf.xlu0
    %v463 = vpop.trf.xlu0
    %v464 = vpop.trf.xlu0
    %v465 = vpop.trf.xlu0
    %v466 = vpop.trf.xlu0
    %v467 = vpop.trf.xlu0
    %v468 = vpop.trf.xlu0
    %v469 = vpop.trf.xlu0
    %v470 = vpop.trf.xlu0
    %v471 = vpop.trf.xlu0
    %v472 = vpop.trf.xlu0
    %v473 = vpop.trf.xlu0
    %474 = vxpose.xlu0.b32.start [1/16] %v440, 128
    %475 = vxpose.xlu0.b32.cont [2/16] 0.0, 128
    %476 = vxpose.xlu0.b32.cont [3/16] 0.0, 128
    %477 = vxpose.xlu0.b32.cont [4/16] 0.0, 128
    %478 = vxpose.xlu0.b32.cont [5/16] 0.0, 128
    %479 = vxpose.xlu0.b32.cont [6/16] 0.0, 128
    %480 = vxpose.xlu0.b32.cont [7/16] 0.0, 128
    %481 = vxpose.xlu0.b32.cont [8/16] 0.0, 128
    %482 = vxpose.xlu0.b32.cont [9/16] 0.0, 128
    %483 = vxpose.xlu0.b32.cont [10/16] 0.0, 128
    %484 = vxpose.xlu0.b32.cont [11/16] 0.0, 128
    %485 = vxpose.xlu0.b32.cont [12/16] 0.0, 128
    %486 = vxpose.xlu0.b32.cont [13/16] 0.0, 128
    %487 = vxpose.xlu0.b32.cont [14/16] 0.0, 128
    %488 = vxpose.xlu0.b32.cont [15/16] 0.0, 128
    %489 = vxpose.xlu0.b32.end [16/16] 0.0, 128
    %v490 = vpop.trf.xlu0
    %v491 = vpop.trf.xlu0
    %v492 = vpop.trf.xlu0
    %v493 = vpop.trf.xlu0
    %v494 = vpop.trf.xlu0
    %v495 = vpop.trf.xlu0
    %v496 = vpop.trf.xlu0
    %v497 = vpop.trf.xlu0
    %v498 = vpop.trf.xlu0
    %v499 = vpop.trf.xlu0
    %v500 = vpop.trf.xlu0
    %v501 = vpop.trf.xlu0
    %v502 = vpop.trf.xlu0
    %v503 = vpop.trf.xlu0
    %v504 = vpop.trf.xlu0
    %v505 = vpop.trf.xlu0
    %v507 = vsel %vm113, %v458, 0
    %v510 = vsel %vm113, %v459, 0
    %v513 = vsel %vm113, %v460, 0
    %v516 = vsel %vm113, %v461, 0
    %v519 = vsel %vm113, %v462, 0
    %v522 = vsel %vm113, %v463, 0
    %v525 = vsel %vm113, %v464, 0
    %v528 = vsel %vm113, %v465, 0
    %v531 = vsel %vm113, %v466, 0
    %v534 = vsel %vm113, %v467, 0
    %v537 = vsel %vm113, %v468, 0
    %v540 = vsel %vm113, %v469, 0
    %v543 = vsel %vm113, %v470, 0
    %v546 = vsel %vm113, %v471, 0
    %v549 = vsel %vm113, %v472, 0
    %v552 = vsel %vm113, %v473, 0
    %v555 = vsel %vm113, %v490, 0
    %v558 = vsel %vm113, %v491, 0
    %v561 = vsel %vm113, %v492, 0
    %v564 = vsel %vm113, %v493, 0
    %v567 = vsel %vm113, %v494, 0
    %v570 = vsel %vm113, %v495, 0
    %v573 = vsel %vm113, %v496, 0
    %v576 = vsel %vm113, %v497, 0
    %v579 = vsel %vm113, %v498, 0
    %v582 = vsel %vm113, %v499, 0
    %v585 = vsel %vm113, %v500, 0
    %v588 = vsel %vm113, %v501, 0
    %v591 = vsel %vm113, %v502, 0
    %v594 = vsel %vm113, %v503, 0
    %v597 = vsel %vm113, %v504, 0
    %v600 = vsel %vm113, %v505, 0
    %v603 = vsel %vm210, %v40, 0
    %605 = vmatprep.subr.mxu0 0.0
    %606 = vmatpush1.msra.mxu0 %v603
    %607 = vmatprep.subr.mxu0 0.0
    %608 = vmatpush1.msra.mxu0 0.0
    %609 = vmatprep.subr.mxu0 0.0
    %610 = vmatpush1.msra.mxu0 0.0
    %611 = vmatprep.subr.mxu0 0.0
    %612 = vmatpush1.msra.mxu0 0.0
    %613 = vmatprep.subr.mxu0 0.0
    %614 = vmatpush1.msra.mxu0 0.0
    %615 = vmatprep.subr.mxu0 0.0
    %616 = vmatpush1.msra.mxu0 0.0
    %617 = vmatprep.subr.mxu0 0.0
    %618 = vmatpush1.msra.mxu0 0.0
    %619 = vmatprep.subr.mxu0 0.0
    %620 = vmatpush1.msra.mxu0 0.0
    %621 = vmatprep.subr.mxu0 0.0
    %622 = vmatpush1.msra.mxu0 0.0
    %623 = vmatprep.subr.mxu0 0.0
    %624 = vmatpush1.msra.mxu0 0.0
    %625 = vmatprep.subr.mxu0 0.0
    %626 = vmatpush1.msra.mxu0 0.0
    %627 = vmatprep.subr.mxu0 0.0
    %628 = vmatpush1.msra.mxu0 0.0
    %629 = vmatprep.subr.mxu0 0.0
    %630 = vmatpush1.msra.mxu0 0.0
    %631 = vmatprep.subr.mxu0 0.0
    %632 = vmatpush1.msra.mxu0 0.0
    %633 = vmatprep.subr.mxu0 0.0
    %634 = vmatpush1.msra.mxu0 0.0
    %635 = vmatprep.subr.mxu0 0.0
    %636 = vmatpush1.msra.mxu0 0.0
    %637 = vmatprep.subr.mxu0 0.0
    %638 = vmatpush1.msra.mxu0 0.0
    %639 = vmatprep.subr.mxu0 0.0
    %640 = vmatpush1.msra.mxu0 0.0
    %641 = vmatprep.subr.mxu0 0.0
    %642 = vmatpush1.msra.mxu0 0.0
    %643 = vmatprep.subr.mxu0 0.0
    %644 = vmatpush1.msra.mxu0 0.0
    %645 = vmatprep.subr.mxu0 0.0
    %646 = vmatpush1.msra.mxu0 0.0
    %647 = vmatprep.subr.mxu0 0.0
    %648 = vmatpush1.msra.mxu0 0.0
    %649 = vmatprep.subr.mxu0 0.0
    %650 = vmatpush1.msra.mxu0 0.0
    %651 = vmatprep.subr.mxu0 0.0
    %652 = vmatpush1.msra.mxu0 0.0
    %653 = vmatprep.subr.mxu0 0.0
    %654 = vmatpush1.msra.mxu0 0.0
    %655 = vmatprep.subr.mxu0 0.0
    %656 = vmatpush1.msra.mxu0 0.0
    %657 = vmatprep.subr.mxu0 0.0
    %658 = vmatpush1.msra.mxu0 0.0
    %659 = vmatprep.subr.mxu0 0.0
    %660 = vmatpush1.msra.mxu0 0.0
    %661 = vmatprep.subr.mxu0 0.0
    %662 = vmatpush1.msra.mxu0 0.0
    %663 = vmatprep.subr.mxu0 0.0
    %664 = vmatpush1.msra.mxu0 0.0
    %665 = vmatprep.subr.mxu0 0.0
    %666 = vmatpush1.msra.mxu0 0.0
    %667 = vmatprep.subr.mxu0 0.0
    %668 = vmatpush1.msra.mxu0 0.0
    %669 = vmatprep.mubr.f32.mxu0 0.0
    %670 = vmatmul.mubr.f32.gmra.mrb[0].mxu0 %v507
    %v671 = vpop.f32.mrb[0].mxu0
    %v672 = vadd.f32 %v281, %v671
    %v673 = vpop.f32.mrb[0].mxu0
    %674 = vmatprep.mubr.f32.mxu0 0.0
    %675 = vmatmul.mubr.f32.gmra.mrb[0].mxu0 %v510
    %v676 = vpop.f32.mrb[0].mxu0
    %v677 = vadd.f32 %v286, %v676
    %v678 = vpop.f32.mrb[0].mxu0
    %679 = vmatprep.mubr.f32.mxu0 0.0
    %680 = vmatmul.mubr.f32.gmra.mrb[0].mxu0 %v513
    %v681 = vpop.f32.mrb[0].mxu0
    %v682 = vadd.f32 %v291, %v681
    %v683 = vpop.f32.mrb[0].mxu0
    %684 = vmatprep.mubr.f32.mxu0 0.0
    %685 = vmatmul.mubr.f32.gmra.mrb[0].mxu0 %v516
    %v686 = vpop.f32.mrb[0].mxu0
    %v687 = vadd.f32 %v296, %v686
    %v688 = vpop.f32.mrb[0].mxu0
    %689 = vmatprep.mubr.f32.mxu0 0.0
    %690 = vmatmul.mubr.f32.gmra.mrb[0].mxu0 %v519
    %v691 = vpop.f32.mrb[0].mxu0
    %v692 = vadd.f32 %v301, %v691
    %v693 = vpop.f32.mrb[0].mxu0
    %694 = vmatprep.mubr.f32.mxu0 0.0
    %695 = vmatmul.mubr.f32.gmra.mrb[0].mxu0 %v522
    %v696 = vpop.f32.mrb[0].mxu0
    %v697 = vadd.f32 %v306, %v696
    %v698 = vpop.f32.mrb[0].mxu0
    %699 = vmatprep.mubr.f32.mxu0 0.0
    %700 = vmatmul.mubr.f32.gmra.mrb[0].mxu0 %v525
    %v701 = vpop.f32.mrb[0].mxu0
    %v702 = vadd.f32 %v311, %v701
    %v703 = vpop.f32.mrb[0].mxu0
    %704 = vmatprep.mubr.f32.mxu0 0.0
    %705 = vmatmul.mubr.f32.gmra.mrb[0].mxu0 %v528
    %v706 = vpop.f32.mrb[0].mxu0
    %v707 = vadd.f32 %v316, %v706
    %v708 = vpop.f32.mrb[0].mxu0
    %709 = vmatprep.mubr.f32.mxu0 0.0
    %710 = vmatmul.mubr.f32.gmra.mrb[0].mxu0 %v531
    %v711 = vpop.f32.mrb[0].mxu0
    %v712 = vadd.f32 %v321, %v711
    %v713 = vpop.f32.mrb[0].mxu0
    %714 = vmatprep.mubr.f32.mxu0 0.0
    %715 = vmatmul.mubr.f32.gmra.mrb[0].mxu0 %v534
    %v716 = vpop.f32.mrb[0].mxu0
    %v717 = vadd.f32 %v326, %v716
    %v718 = vpop.f32.mrb[0].mxu0
    %719 = vmatprep.mubr.f32.mxu0 0.0
    %720 = vmatmul.mubr.f32.gmra.mrb[0].mxu0 %v537
    %v721 = vpop.f32.mrb[0].mxu0
    %v722 = vadd.f32 %v331, %v721
    %v723 = vpop.f32.mrb[0].mxu0
    %724 = vmatprep.mubr.f32.mxu0 0.0
    %725 = vmatmul.mubr.f32.gmra.mrb[0].mxu0 %v540
    %v726 = vpop.f32.mrb[0].mxu0
    %v727 = vadd.f32 %v336, %v726
    %v728 = vpop.f32.mrb[0].mxu0
    %729 = vmatprep.mubr.f32.mxu0 0.0
    %730 = vmatmul.mubr.f32.gmra.mrb[0].mxu0 %v543
    %v731 = vpop.f32.mrb[0].mxu0
    %v732 = vadd.f32 %v341, %v731
    %v733 = vpop.f32.mrb[0].mxu0
    %734 = vmatprep.mubr.f32.mxu0 0.0
    %735 = vmatmul.mubr.f32.gmra.mrb[0].mxu0 %v546
    %v736 = vpop.f32.mrb[0].mxu0
    %v737 = vadd.f32 %v346, %v736
    %v738 = vpop.f32.mrb[0].mxu0
    %739 = vmatprep.mubr.f32.mxu0 0.0
    %740 = vmatmul.mubr.f32.gmra.mrb[0].mxu0 %v549
    %v741 = vpop.f32.mrb[0].mxu0
    %v742 = vadd.f32 %v351, %v741
    %v743 = vpop.f32.mrb[0].mxu0
    %744 = vmatprep.mubr.f32.mxu0 0.0
    %745 = vmatmul.mubr.f32.gmra.mrb[0].mxu0 %v552
    %v746 = vpop.f32.mrb[0].mxu0
    %v747 = vadd.f32 %v356, %v746
    %v748 = vpop.f32.mrb[0].mxu0
    %749 = vmatprep.mubr.f32.mxu0 0.0
    %750 = vmatmul.mubr.f32.gmra.mrb[0].mxu0 %v555
    %v751 = vpop.f32.mrb[0].mxu0
    %v752 = vadd.f32 %v361, %v751
    %v753 = vpop.f32.mrb[0].mxu0
    %754 = vmatprep.mubr.f32.mxu0 0.0
    %755 = vmatmul.mubr.f32.gmra.mrb[0].mxu0 %v558
    %v756 = vpop.f32.mrb[0].mxu0
    %v757 = vadd.f32 %v366, %v756
    %v758 = vpop.f32.mrb[0].mxu0
    %759 = vmatprep.mubr.f32.mxu0 0.0
    %760 = vmatmul.mubr.f32.gmra.mrb[0].mxu0 %v561
    %v761 = vpop.f32.mrb[0].mxu0
    %v762 = vadd.f32 %v371, %v761
    %v763 = vpop.f32.mrb[0].mxu0
    %764 = vmatprep.mubr.f32.mxu0 0.0
    %765 = vmatmul.mubr.f32.gmra.mrb[0].mxu0 %v564
    %v766 = vpop.f32.mrb[0].mxu0
    %v767 = vadd.f32 %v376, %v766
    %v768 = vpop.f32.mrb[0].mxu0
    %769 = vmatprep.mubr.f32.mxu0 0.0
    %770 = vmatmul.mubr.f32.gmra.mrb[0].mxu0 %v567
    %v771 = vpop.f32.mrb[0].mxu0
    %v772 = vadd.f32 %v381, %v771
    %v773 = vpop.f32.mrb[0].mxu0
    %774 = vmatprep.mubr.f32.mxu0 0.0
    %775 = vmatmul.mubr.f32.gmra.mrb[0].mxu0 %v570
    %v776 = vpop.f32.mrb[0].mxu0
    %v777 = vadd.f32 %v386, %v776
    %v778 = vpop.f32.mrb[0].mxu0
    %779 = vmatprep.mubr.f32.mxu0 0.0
    %780 = vmatmul.mubr.f32.gmra.mrb[0].mxu0 %v573
    %v781 = vpop.f32.mrb[0].mxu0
    %v782 = vadd.f32 %v391, %v781
    %v783 = vpop.f32.mrb[0].mxu0
    %784 = vmatprep.mubr.f32.mxu0 0.0
    %785 = vmatmul.mubr.f32.gmra.mrb[0].mxu0 %v576
    %v786 = vpop.f32.mrb[0].mxu0
    %v787 = vadd.f32 %v396, %v786
    %v788 = vpop.f32.mrb[0].mxu0
    %789 = vmatprep.mubr.f32.mxu0 0.0
    %790 = vmatmul.mubr.f32.gmra.mrb[0].mxu0 %v579
    %v791 = vpop.f32.mrb[0].mxu0
    %v792 = vadd.f32 %v401, %v791
    %v793 = vpop.f32.mrb[0].mxu0
    %794 = vmatprep.mubr.f32.mxu0 0.0
    %795 = vmatmul.mubr.f32.gmra.mrb[0].mxu0 %v582
    %v796 = vpop.f32.mrb[0].mxu0
    %v797 = vadd.f32 %v406, %v796
    %v798 = vpop.f32.mrb[0].mxu0
    %799 = vmatprep.mubr.f32.mxu0 0.0
    %800 = vmatmul.mubr.f32.gmra.mrb[0].mxu0 %v585
    %v801 = vpop.f32.mrb[0].mxu0
    %v802 = vadd.f32 %v411, %v801
    %v803 = vpop.f32.mrb[0].mxu0
    %804 = vmatprep.mubr.f32.mxu0 0.0
    %805 = vmatmul.mubr.f32.gmra.mrb[0].mxu0 %v588
    %v806 = vpop.f32.mrb[0].mxu0
    %v807 = vadd.f32 %v416, %v806
    %v808 = vpop.f32.mrb[0].mxu0
    %809 = vmatprep.mubr.f32.mxu0 0.0
    %810 = vmatmul.mubr.f32.gmra.mrb[0].mxu0 %v591
    %v811 = vpop.f32.mrb[0].mxu0
    %v812 = vadd.f32 %v421, %v811
    %v813 = vpop.f32.mrb[0].mxu0
    %814 = vmatprep.mubr.f32.mxu0 0.0
    %815 = vmatmul.mubr.f32.gmra.mrb[0].mxu0 %v594
    %v816 = vpop.f32.mrb[0].mxu0
    %v817 = vadd.f32 %v426, %v816
    %v818 = vpop.f32.mrb[0].mxu0
    %819 = vmatprep.mubr.f32.mxu0 0.0
    %820 = vmatmul.mubr.f32.gmra.mrb[0].mxu0 %v597
    %v821 = vpop.f32.mrb[0].mxu0
    %v822 = vadd.f32 %v431, %v821
    %v823 = vpop.f32.mrb[0].mxu0
    %824 = vmatprep.mubr.f32.mxu0 0.0
    %825 = vmatmul.mubr.f32.gmra.mrb[0].mxu0 %v600
    %v826 = vpop.f32.mrb[0].mxu0
    %v827 = vadd.f32 %v436, %v826
    %v828 = vpop.f32.mrb[0].mxu0
    %829 = vdwg.mxu0
    %v830 = vmax.f32 %v672, 0.0
    %v831 = vmax.f32 %v677, 0.0
    %v832 = vmax.f32 %v682, 0.0
    %v833 = vmax.f32 %v687, 0.0
    %v834 = vmax.f32 %v692, 0.0
    %v835 = vmax.f32 %v697, 0.0
    %v836 = vmax.f32 %v702, 0.0
    %v837 = vmax.f32 %v707, 0.0
    %v838 = vmax.f32 %v712, 0.0
    %v839 = vmax.f32 %v717, 0.0
    %v840 = vmax.f32 %v722, 0.0
    %v841 = vmax.f32 %v727, 0.0
    %v842 = vmax.f32 %v732, 0.0
    %v843 = vmax.f32 %v737, 0.0
    %v844 = vmax.f32 %v742, 0.0
    %v845 = vmax.f32 %v747, 0.0
    %v846 = vmax.f32 %v752, 0.0
    %v847 = vmax.f32 %v757, 0.0
    %v848 = vmax.f32 %v762, 0.0
    %v849 = vmax.f32 %v767, 0.0
    %v850 = vmax.f32 %v772, 0.0
    %v851 = vmax.f32 %v777, 0.0
    %v852 = vmax.f32 %v782, 0.0
    %v853 = vmax.f32 %v787, 0.0
    %v854 = vmax.f32 %v792, 0.0
    %v855 = vmax.f32 %v797, 0.0
    %v856 = vmax.f32 %v802, 0.0
    %v857 = vmax.f32 %v807, 0.0
    %v858 = vmax.f32 %v812, 0.0
    %v859 = vmax.f32 %v817, 0.0
    %v860 = vmax.f32 %v822, 0.0
    %v861 = vmax.f32 %v827, 0.0
    %862 = vmatprep.subr.mxu0 0.0
    %863 = vmatpush1.msra.mxu0 %v830
    %864 = vmatprep.subr.mxu0 0.0
    %865 = vmatpush1.msra.mxu0 %v831
    %866 = vmatprep.subr.mxu0 0.0
    %867 = vmatpush1.msra.mxu0 %v832
    %868 = vmatprep.subr.mxu0 0.0
    %869 = vmatpush1.msra.mxu0 %v833
    %870 = vmatprep.subr.mxu0 0.0
    %871 = vmatpush1.msra.mxu0 %v834
    %872 = vmatprep.subr.mxu0 0.0
    %873 = vmatpush1.msra.mxu0 %v835
    %874 = vmatprep.subr.mxu0 0.0
    %875 = vmatpush1.msra.mxu0 %v836
    %876 = vmatprep.subr.mxu0 0.0
    %877 = vmatpush1.msra.mxu0 %v837
    %878 = vmatprep.subr.mxu0 0.0
    %879 = vmatpush1.msra.mxu0 %v838
    %880 = vmatprep.subr.mxu0 0.0
    %881 = vmatpush1.msra.mxu0 %v839
    %882 = vmatprep.subr.mxu0 0.0
    %883 = vmatpush1.msra.mxu0 %v840
    %884 = vmatprep.subr.mxu0 0.0
    %885 = vmatpush1.msra.mxu0 %v841
    %886 = vmatprep.subr.mxu0 0.0
    %887 = vmatpush1.msra.mxu0 %v842
    %888 = vmatprep.subr.mxu0 0.0
    %889 = vmatpush1.msra.mxu0 %v843
    %890 = vmatprep.subr.mxu0 0.0
    %891 = vmatpush1.msra.mxu0 %v844
    %892 = vmatprep.subr.mxu0 0.0
    %893 = vmatpush1.msra.mxu0 %v845
    %894 = vmatprep.subr.mxu0 0.0
    %895 = vmatpush1.msra.mxu0 %v846
    %896 = vmatprep.subr.mxu0 0.0
    %897 = vmatpush1.msra.mxu0 %v847
    %898 = vmatprep.subr.mxu0 0.0
    %899 = vmatpush1.msra.mxu0 %v848
    %900 = vmatprep.subr.mxu0 0.0
    %901 = vmatpush1.msra.mxu0 %v849
    %902 = vmatprep.subr.mxu0 0.0
    %903 = vmatpush1.msra.mxu0 %v850
    %904 = vmatprep.subr.mxu0 0.0
    %905 = vmatpush1.msra.mxu0 %v851
    %906 = vmatprep.subr.mxu0 0.0
    %907 = vmatpush1.msra.mxu0 %v852
    %908 = vmatprep.subr.mxu0 0.0
    %909 = vmatpush1.msra.mxu0 %v853
    %910 = vmatprep.subr.mxu0 0.0
    %911 = vmatpush1.msra.mxu0 %v854
    %912 = vmatprep.subr.mxu0 0.0
    %913 = vmatpush1.msra.mxu0 %v855
    %914 = vmatprep.subr.mxu0 0.0
    %915 = vmatpush1.msra.mxu0 %v856
    %916 = vmatprep.subr.mxu0 0.0
    %917 = vmatpush1.msra.mxu0 %v857
    %918 = vmatprep.subr.mxu0 0.0
    %919 = vmatpush1.msra.mxu0 %v858
    %920 = vmatprep.subr.mxu0 0.0
    %921 = vmatpush1.msra.mxu0 %v859
    %922 = vmatprep.subr.mxu0 0.0
    %923 = vmatpush1.msra.mxu0 %v860
    %924 = vmatprep.subr.mxu0 0.0
    %925 = vmatpush1.msra.mxu0 %v861
    %926 = vmatprep.mubr.f32.mxu0 1.0
    %927 = vmatmul.mubr.f32.gmra.mrb[0].mxu0 1.0
    %v928 = vpop.f32.mrb[0].mxu0
    %v929 = vadd.f32 0.0, %v928
    %v930 = vpop.f32.mrb[0].mxu0
    %931 = vdwg.mxu0
    %s932 = scalar_lea.vmem %s0, 4
    %v933 = vld [vmem:[%s932] sm:$0xf]
    %v934 = vunpack.c.l.bf16 %v933
    %v935 = vmul.f32 %v934, 0.5
    %v936 = vtanh.pop %v935
    %v938 = vcombine.high %v936, %v936
    %940 = vxpose.xlu0.b32.start [1/16] %v936, 128
    %941 = vxpose.xlu0.b32.cont [2/16] 0.0, 128
    %942 = vxpose.xlu0.b32.cont [3/16] 0.0, 128
    %943 = vxpose.xlu0.b32.cont [4/16] 0.0, 128
    %944 = vxpose.xlu0.b32.cont [5/16] 0.0, 128
    %945 = vxpose.xlu0.b32.cont [6/16] 0.0, 128
    %946 = vxpose.xlu0.b32.cont [7/16] 0.0, 128
    %947 = vxpose.xlu0.b32.cont [8/16] 0.0, 128
    %948 = vxpose.xlu0.b32.cont [9/16] 0.0, 128
    %949 = vxpose.xlu0.b32.cont [10/16] 0.0, 128
    %950 = vxpose.xlu0.b32.cont [11/16] 0.0, 128
    %951 = vxpose.xlu0.b32.cont [12/16] 0.0, 128
    %952 = vxpose.xlu0.b32.cont [13/16] 0.0, 128
    %953 = vxpose.xlu0.b32.cont [14/16] 0.0, 128
    %954 = vxpose.xlu0.b32.cont [15/16] 0.0, 128
    %955 = vxpose.xlu0.b32.end [16/16] 0.0, 128
    %v956 = vpop.trf.xlu0
    %v957 = vpop.trf.xlu0
    %v958 = vpop.trf.xlu0
    %v959 = vpop.trf.xlu0
    %v960 = vpop.trf.xlu0
    %v961 = vpop.trf.xlu0
    %v962 = vpop.trf.xlu0
    %v963 = vpop.trf.xlu0
    %v964 = vpop.trf.xlu0
    %v965 = vpop.trf.xlu0
    %v966 = vpop.trf.xlu0
    %v967 = vpop.trf.xlu0
    %v968 = vpop.trf.xlu0
    %v969 = vpop.trf.xlu0
    %v970 = vpop.trf.xlu0
    %v971 = vpop.trf.xlu0
    %972 = vxpose.xlu0.b32.start [1/16] %v938, 128
    %973 = vxpose.xlu0.b32.cont [2/16] 0.0, 128
    %974 = vxpose.xlu0.b32.cont [3/16] 0.0, 128
    %975 = vxpose.xlu0.b32.cont [4/16] 0.0, 128
    %976 = vxpose.xlu0.b32.cont [5/16] 0.0, 128
    %977 = vxpose.xlu0.b32.cont [6/16] 0.0, 128
    %978 = vxpose.xlu0.b32.cont [7/16] 0.0, 128
    %979 = vxpose.xlu0.b32.cont [8/16] 0.0, 128
    %980 = vxpose.xlu0.b32.cont [9/16] 0.0, 128
    %981 = vxpose.xlu0.b32.cont [10/16] 0.0, 128
    %982 = vxpose.xlu0.b32.cont [11/16] 0.0, 128
    %983 = vxpose.xlu0.b32.cont [12/16] 0.0, 128
    %984 = vxpose.xlu0.b32.cont [13/16] 0.0, 128
    %985 = vxpose.xlu0.b32.cont [14/16] 0.0, 128
    %986 = vxpose.xlu0.b32.cont [15/16] 0.0, 128
    %987 = vxpose.xlu0.b32.end [16/16] 0.0, 128
    %v988 = vpop.trf.xlu0
    %v989 = vpop.trf.xlu0
    %v990 = vpop.trf.xlu0
    %v991 = vpop.trf.xlu0
    %v992 = vpop.trf.xlu0
    %v993 = vpop.trf.xlu0
    %v994 = vpop.trf.xlu0
    %v995 = vpop.trf.xlu0
    %v996 = vpop.trf.xlu0
    %v997 = vpop.trf.xlu0
    %v998 = vpop.trf.xlu0
    %v999 = vpop.trf.xlu0
    %v1000 = vpop.trf.xlu0
    %v1001 = vpop.trf.xlu0
    %v1002 = vpop.trf.xlu0
    %v1003 = vpop.trf.xlu0
    %v1005 = vsel %vm113, %v956, 0
    %v1008 = vsel %vm113, %v957, 0
    %v1011 = vsel %vm113, %v958, 0
    %v1014 = vsel %vm113, %v959, 0
    %v1017 = vsel %vm113, %v960, 0
    %v1020 = vsel %vm113, %v961, 0
    %v1023 = vsel %vm113, %v962, 0
    %v1026 = vsel %vm113, %v963, 0
    %v1029 = vsel %vm113, %v964, 0
    %v1032 = vsel %vm113, %v965, 0
    %v1035 = vsel %vm113, %v966, 0
    %v1038 = vsel %vm113, %v967, 0
    %v1041 = vsel %vm113, %v968, 0
    %v1044 = vsel %vm113, %v969, 0
    %v1047 = vsel %vm113, %v970, 0
    %v1050 = vsel %vm113, %v971, 0
    %v1053 = vsel %vm113, %v988, 0
    %v1056 = vsel %vm113, %v989, 0
    %v1059 = vsel %vm113, %v990, 0
    %v1062 = vsel %vm113, %v991, 0
    %v1065 = vsel %vm113, %v992, 0
    %v1068 = vsel %vm113, %v993, 0
    %v1071 = vsel %vm113, %v994, 0
    %v1074 = vsel %vm113, %v995, 0
    %v1077 = vsel %vm113, %v996, 0
    %v1080 = vsel %vm113, %v997, 0
    %v1083 = vsel %vm113, %v998, 0
    %v1086 = vsel %vm113, %v999, 0
    %v1089 = vsel %vm113, %v1000, 0
    %v1092 = vsel %vm113, %v1001, 0
    %v1095 = vsel %vm113, %v1002, 0
    %v1098 = vsel %vm113, %v1003, 0
    %1100 = vmatprep.subr.mxu0 0.0
    %1101 = vmatpush1.msra.mxu0 %v212
    %1102 = vmatprep.subr.mxu0 0.0
    %1103 = vmatpush1.msra.mxu0 0.0
    %1104 = vmatprep.subr.mxu0 0.0
    %1105 = vmatpush1.msra.mxu0 0.0
    %1106 = vmatprep.subr.mxu0 0.0
    %1107 = vmatpush1.msra.mxu0 0.0
    %1108 = vmatprep.subr.mxu0 0.0
    %1109 = vmatpush1.msra.mxu0 0.0
    %1110 = vmatprep.subr.mxu0 0.0
    %1111 = vmatpush1.msra.mxu0 0.0
    %1112 = vmatprep.subr.mxu0 0.0
    %1113 = vmatpush1.msra.mxu0 0.0
    %1114 = vmatprep.subr.mxu0 0.0
    %1115 = vmatpush1.msra.mxu0 0.0
    %1116 = vmatprep.subr.mxu0 0.0
    %1117 = vmatpush1.msra.mxu0 0.0
    %1118 = vmatprep.subr.mxu0 0.0
    %1119 = vmatpush1.msra.mxu0 0.0
    %1120 = vmatprep.subr.mxu0 0.0
    %1121 = vmatpush1.msra.mxu0 0.0
    %1122 = vmatprep.subr.mxu0 0.0
    %1123 = vmatpush1.msra.mxu0 0.0
    %1124 = vmatprep.subr.mxu0 0.0
    %1125 = vmatpush1.msra.mxu0 0.0
    %1126 = vmatprep.subr.mxu0 0.0
    %1127 = vmatpush1.msra.mxu0 0.0
    %1128 = vmatprep.subr.mxu0 0.0
    %1129 = vmatpush1.msra.mxu0 0.0
    %1130 = vmatprep.subr.mxu0 0.0
    %1131 = vmatpush1.msra.mxu0 0.0
    %1132 = vmatprep.subr.mxu0 0.0
    %1133 = vmatpush1.msra.mxu0 0.0
    %1134 = vmatprep.subr.mxu0 0.0
    %1135 = vmatpush1.msra.mxu0 0.0
    %1136 = vmatprep.subr.mxu0 0.0
    %1137 = vmatpush1.msra.mxu0 0.0
    %1138 = vmatprep.subr.mxu0 0.0
    %1139 = vmatpush1.msra.mxu0 0.0
    %1140 = vmatprep.subr.mxu0 0.0
    %1141 = vmatpush1.msra.mxu0 0.0
    %1142 = vmatprep.subr.mxu0 0.0
    %1143 = vmatpush1.msra.mxu0 0.0
    %1144 = vmatprep.subr.mxu0 0.0
    %1145 = vmatpush1.msra.mxu0 0.0
    %1146 = vmatprep.subr.mxu0 0.0
    %1147 = vmatpush1.msra.mxu0 0.0
    %1148 = vmatprep.subr.mxu0 0.0
    %1149 = vmatpush1.msra.mxu0 0.0
    %1150 = vmatprep.subr.mxu0 0.0
    %1151 = vmatpush1.msra.mxu0 0.0
    %1152 = vmatprep.subr.mxu0 0.0
    %1153 = vmatpush1.msra.mxu0 0.0
    %1154 = vmatprep.subr.mxu0 0.0
    %1155 = vmatpush1.msra.mxu0 0.0
    %1156 = vmatprep.subr.mxu0 0.0
    %1157 = vmatpush1.msra.mxu0 0.0
    %1158 = vmatprep.subr.mxu0 0.0
    %1159 = vmatpush1.msra.mxu0 0.0
    %1160 = vmatprep.subr.mxu0 0.0
    %1161 = vmatpush1.msra.mxu0 0.0
    %1162 = vmatprep.subr.mxu0 0.0
    %1163 = vmatpush1.msra.mxu0 0.0
    %1164 = vmatprep.mubr.f32.mxu0 0.0
    %1165 = vmatmul.mubr.f32.gmra.mrb[0].mxu0 %v1005
    %v1166 = vpop.f32.mrb[0].mxu0
    %v1167 = vadd.f32 0.0, %v1166
    %v1168 = vpop.f32.mrb[0].mxu0
    %1169 = vmatprep.mubr.f32.mxu0 0.0
    %1170 = vmatmul.mubr.f32.gmra.mrb[0].mxu0 %v1008
    %v1171 = vpop.f32.mrb[0].mxu0
    %v1172 = vadd.f32 0.0, %v1171
    %v1173 = vpop.f32.mrb[0].mxu0
    %1174 = vmatprep.mubr.f32.mxu0 0.0
    %1175 = vmatmul.mubr.f32.gmra.mrb[0].mxu0 %v1011
    %v1176 = vpop.f32.mrb[0].mxu0
    %v1177 = vadd.f32 0.0, %v1176
    %v1178 = vpop.f32.mrb[0].mxu0
    %1179 = vmatprep.mubr.f32.mxu0 0.0
    %1180 = vmatmul.mubr.f32.gmra.mrb[0].mxu0 %v1014
    %v1181 = vpop.f32.mrb[0].mxu0
    %v1182 = vadd.f32 0.0, %v1181
    %v1183 = vpop.f32.mrb[0].mxu0
    %1184 = vmatprep.mubr.f32.mxu0 0.0
    %1185 = vmatmul.mubr.f32.gmra.mrb[0].mxu0 %v1017
    %v1186 = vpop.f32.mrb[0].mxu0
    %v1187 = vadd.f32 0.0, %v1186
    %v1188 = vpop.f32.mrb[0].mxu0
    %1189 = vmatprep.mubr.f32.mxu0 0.0
    %1190 = vmatmul.mubr.f32.gmra.mrb[0].mxu0 %v1020
    %v1191 = vpop.f32.mrb[0].mxu0
    %v1192 = vadd.f32 0.0, %v1191
    %v1193 = vpop.f32.mrb[0].mxu0
    %1194 = vmatprep.mubr.f32.mxu0 0.0
    %1195 = vmatmul.mubr.f32.gmra.mrb[0].mxu0 %v1023
    %v1196 = vpop.f32.mrb[0].mxu0
    %v1197 = vadd.f32 0.0, %v1196
    %v1198 = vpop.f32.mrb[0].mxu0
    %1199 = vmatprep.mubr.f32.mxu0 0.0
    %1200 = vmatmul.mubr.f32.gmra.mrb[0].mxu0 %v1026
    %v1201 = vpop.f32.mrb[0].mxu0
    %v1202 = vadd.f32 0.0, %v1201
    %v1203 = vpop.f32.mrb[0].mxu0
    %1204 = vmatprep.mubr.f32.mxu0 0.0
    %1205 = vmatmul.mubr.f32.gmra.mrb[0].mxu0 %v1029
    %v1206 = vpop.f32.mrb[0].mxu0
    %v1207 = vadd.f32 0.0, %v1206
    %v1208 = vpop.f32.mrb[0].mxu0
    %1209 = vmatprep.mubr.f32.mxu0 0.0
    %1210 = vmatmul.mubr.f32.gmra.mrb[0].mxu0 %v1032
    %v1211 = vpop.f32.mrb[0].mxu0
    %v1212 = vadd.f32 0.0, %v1211
    %v1213 = vpop.f32.mrb[0].mxu0
    %1214 = vmatprep.mubr.f32.mxu0 0.0
    %1215 = vmatmul.mubr.f32.gmra.mrb[0].mxu0 %v1035
    %v1216 = vpop.f32.mrb[0].mxu0
    %v1217 = vadd.f32 0.0, %v1216
    %v1218 = vpop.f32.mrb[0].mxu0
    %1219 = vmatprep.mubr.f32.mxu0 0.0
    %1220 = vmatmul.mubr.f32.gmra.mrb[0].mxu0 %v1038
    %v1221 = vpop.f32.mrb[0].mxu0
    %v1222 = vadd.f32 0.0, %v1221
    %v1223 = vpop.f32.mrb[0].mxu0
    %1224 = vmatprep.mubr.f32.mxu0 0.0
    %1225 = vmatmul.mubr.f32.gmra.mrb[0].mxu0 %v1041
    %v1226 = vpop.f32.mrb[0].mxu0
    %v1227 = vadd.f32 0.0, %v1226
    %v1228 = vpop.f32.mrb[0].mxu0
    %1229 = vmatprep.mubr.f32.mxu0 0.0
    %1230 = vmatmul.mubr.f32.gmra.mrb[0].mxu0 %v1044
    %v1231 = vpop.f32.mrb[0].mxu0
    %v1232 = vadd.f32 0.0, %v1231
    %v1233 = vpop.f32.mrb[0].mxu0
    %1234 = vmatprep.mubr.f32.mxu0 0.0
    %1235 = vmatmul.mubr.f32.gmra.mrb[0].mxu0 %v1047
    %v1236 = vpop.f32.mrb[0].mxu0
    %v1237 = vadd.f32 0.0, %v1236
    %v1238 = vpop.f32.mrb[0].mxu0
    %1239 = vmatprep.mubr.f32.mxu0 0.0
    %1240 = vmatmul.mubr.f32.gmra.mrb[0].mxu0 %v1050
    %v1241 = vpop.f32.mrb[0].mxu0
    %v1242 = vadd.f32 0.0, %v1241
    %v1243 = vpop.f32.mrb[0].mxu0
    %1244 = vmatprep.mubr.f32.mxu0 0.0
    %1245 = vmatmul.mubr.f32.gmra.mrb[0].mxu0 %v1053
    %v1246 = vpop.f32.mrb[0].mxu0
    %v1247 = vadd.f32 0.0, %v1246
    %v1248 = vpop.f32.mrb[0].mxu0
    %1249 = vmatprep.mubr.f32.mxu0 0.0
    %1250 = vmatmul.mubr.f32.gmra.mrb[0].mxu0 %v1056
    %v1251 = vpop.f32.mrb[0].mxu0
    %v1252 = vadd.f32 0.0, %v1251
    %v1253 = vpop.f32.mrb[0].mxu0
    %1254 = vmatprep.mubr.f32.mxu0 0.0
    %1255 = vmatmul.mubr.f32.gmra.mrb[0].mxu0 %v1059
    %v1256 = vpop.f32.mrb[0].mxu0
    %v1257 = vadd.f32 0.0, %v1256
    %v1258 = vpop.f32.mrb[0].mxu0
    %1259 = vmatprep.mubr.f32.mxu0 0.0
    %1260 = vmatmul.mubr.f32.gmra.mrb[0].mxu0 %v1062
    %v1261 = vpop.f32.mrb[0].mxu0
    %v1262 = vadd.f32 0.0, %v1261
    %v1263 = vpop.f32.mrb[0].mxu0
    %1264 = vmatprep.mubr.f32.mxu0 0.0
    %1265 = vmatmul.mubr.f32.gmra.mrb[0].mxu0 %v1065
    %v1266 = vpop.f32.mrb[0].mxu0
    %v1267 = vadd.f32 0.0, %v1266
    %v1268 = vpop.f32.mrb[0].mxu0
    %1269 = vmatprep.mubr.f32.mxu0 0.0
    %1270 = vmatmul.mubr.f32.gmra.mrb[0].mxu0 %v1068
    %v1271 = vpop.f32.mrb[0].mxu0
    %v1272 = vadd.f32 0.0, %v1271
    %v1273 = vpop.f32.mrb[0].mxu0
    %1274 = vmatprep.mubr.f32.mxu0 0.0
    %1275 = vmatmul.mubr.f32.gmra.mrb[0].mxu0 %v1071
    %v1276 = vpop.f32.mrb[0].mxu0
    %v1277 = vadd.f32 0.0, %v1276
    %v1278 = vpop.f32.mrb[0].mxu0
    %1279 = vmatprep.mubr.f32.mxu0 0.0
    %1280 = vmatmul.mubr.f32.gmra.mrb[0].mxu0 %v1074
    %v1281 = vpop.f32.mrb[0].mxu0
    %v1282 = vadd.f32 0.0, %v1281
    %v1283 = vpop.f32.mrb[0].mxu0
    %1284 = vmatprep.mubr.f32.mxu0 0.0
    %1285 = vmatmul.mubr.f32.gmra.mrb[0].mxu0 %v1077
    %v1286 = vpop.f32.mrb[0].mxu0
    %v1287 = vadd.f32 0.0, %v1286
    %v1288 = vpop.f32.mrb[0].mxu0
    %1289 = vmatprep.mubr.f32.mxu0 0.0
    %1290 = vmatmul.mubr.f32.gmra.mrb[0].mxu0 %v1080
    %v1291 = vpop.f32.mrb[0].mxu0
    %v1292 = vadd.f32 0.0, %v1291
    %v1293 = vpop.f32.mrb[0].mxu0
    %1294 = vmatprep.mubr.f32.mxu0 0.0
    %1295 = vmatmul.mubr.f32.gmra.mrb[0].mxu0 %v1083
    %v1296 = vpop.f32.mrb[0].mxu0
    %v1297 = vadd.f32 0.0, %v1296
    %v1298 = vpop.f32.mrb[0].mxu0
    %1299 = vmatprep.mubr.f32.mxu0 0.0
    %1300 = vmatmul.mubr.f32.gmra.mrb[0].mxu0 %v1086
    %v1301 = vpop.f32.mrb[0].mxu0
    %v1302 = vadd.f32 0.0, %v1301
    %v1303 = vpop.f32.mrb[0].mxu0
    %1304 = vmatprep.mubr.f32.mxu0 0.0
    %1305 = vmatmul.mubr.f32.gmra.mrb[0].mxu0 %v1089
    %v1306 = vpop.f32.mrb[0].mxu0
    %v1307 = vadd.f32 0.0, %v1306
    %v1308 = vpop.f32.mrb[0].mxu0
    %1309 = vmatprep.mubr.f32.mxu0 0.0
    %1310 = vmatmul.mubr.f32.gmra.mrb[0].mxu0 %v1092
    %v1311 = vpop.f32.mrb[0].mxu0
    %v1312 = vadd.f32 0.0, %v1311
    %v1313 = vpop.f32.mrb[0].mxu0
    %1314 = vmatprep.mubr.f32.mxu0 0.0
    %1315 = vmatmul.mubr.f32.gmra.mrb[0].mxu0 %v1095
    %v1316 = vpop.f32.mrb[0].mxu0
    %v1317 = vadd.f32 0.0, %v1316
    %v1318 = vpop.f32.mrb[0].mxu0
    %1319 = vmatprep.mubr.f32.mxu0 0.0
    %1320 = vmatmul.mubr.f32.gmra.mrb[0].mxu0 %v1098
    %v1321 = vpop.f32.mrb[0].mxu0
    %v1322 = vadd.f32 0.0, %v1321
    %v1323 = vpop.f32.mrb[0].mxu0
    %1324 = vdwg.mxu0
    %v1326 = vcombine.high %v934, %v934
    %1328 = vxpose.xlu0.b32.start [1/16] %v934, 128
    %1329 = vxpose.xlu0.b32.cont [2/16] 0.0, 128
    %1330 = vxpose.xlu0.b32.cont [3/16] 0.0, 128
    %1331 = vxpose.xlu0.b32.cont [4/16] 0.0, 128
    %1332 = vxpose.xlu0.b32.cont [5/16] 0.0, 128
    %1333 = vxpose.xlu0.b32.cont [6/16] 0.0, 128
    %1334 = vxpose.xlu0.b32.cont [7/16] 0.0, 128
    %1335 = vxpose.xlu0.b32.cont [8/16] 0.0, 128
    %1336 = vxpose.xlu0.b32.cont [9/16] 0.0, 128
    %1337 = vxpose.xlu0.b32.cont [10/16] 0.0, 128
    %1338 = vxpose.xlu0.b32.cont [11/16] 0.0, 128
    %1339 = vxpose.xlu0.b32.cont [12/16] 0.0, 128
    %1340 = vxpose.xlu0.b32.cont [13/16] 0.0, 128
    %1341 = vxpose.xlu0.b32.cont [14/16] 0.0, 128
    %1342 = vxpose.xlu0.b32.cont [15/16] 0.0, 128
    %1343 = vxpose.xlu0.b32.end [16/16] 0.0, 128
    %v1344 = vpop.trf.xlu0
    %v1345 = vpop.trf.xlu0
    %v1346 = vpop.trf.xlu0
    %v1347 = vpop.trf.xlu0
    %v1348 = vpop.trf.xlu0
    %v1349 = vpop.trf.xlu0
    %v1350 = vpop.trf.xlu0
    %v1351 = vpop.trf.xlu0
    %v1352 = vpop.trf.xlu0
    %v1353 = vpop.trf.xlu0
    %v1354 = vpop.trf.xlu0
    %v1355 = vpop.trf.xlu0
    %v1356 = vpop.trf.xlu0
    %v1357 = vpop.trf.xlu0
    %v1358 = vpop.trf.xlu0
    %v1359 = vpop.trf.xlu0
    %1360 = vxpose.xlu0.b32.start [1/16] %v1326, 128
    %1361 = vxpose.xlu0.b32.cont [2/16] 0.0, 128
    %1362 = vxpose.xlu0.b32.cont [3/16] 0.0, 128
    %1363 = vxpose.xlu0.b32.cont [4/16] 0.0, 128
    %1364 = vxpose.xlu0.b32.cont [5/16] 0.0, 128
    %1365 = vxpose.xlu0.b32.cont [6/16] 0.0, 128
    %1366 = vxpose.xlu0.b32.cont [7/16] 0.0, 128
    %1367 = vxpose.xlu0.b32.cont [8/16] 0.0, 128
    %1368 = vxpose.xlu0.b32.cont [9/16] 0.0, 128
    %1369 = vxpose.xlu0.b32.cont [10/16] 0.0, 128
    %1370 = vxpose.xlu0.b32.cont [11/16] 0.0, 128
    %1371 = vxpose.xlu0.b32.cont [12/16] 0.0, 128
    %1372 = vxpose.xlu0.b32.cont [13/16] 0.0, 128
    %1373 = vxpose.xlu0.b32.cont [14/16] 0.0, 128
    %1374 = vxpose.xlu0.b32.cont [15/16] 0.0, 128
    %1375 = vxpose.xlu0.b32.end [16/16] 0.0, 128
    %v1376 = vpop.trf.xlu0
    %v1377 = vpop.trf.xlu0
    %v1378 = vpop.trf.xlu0
    %v1379 = vpop.trf.xlu0
    %v1380 = vpop.trf.xlu0
    %v1381 = vpop.trf.xlu0
    %v1382 = vpop.trf.xlu0
    %v1383 = vpop.trf.xlu0
    %v1384 = vpop.trf.xlu0
    %v1385 = vpop.trf.xlu0
    %v1386 = vpop.trf.xlu0
    %v1387 = vpop.trf.xlu0
    %v1388 = vpop.trf.xlu0
    %v1389 = vpop.trf.xlu0
    %v1390 = vpop.trf.xlu0
    %v1391 = vpop.trf.xlu0
    %v1393 = vsel %vm113, %v1344, 0
    %v1396 = vsel %vm113, %v1345, 0
    %v1399 = vsel %vm113, %v1346, 0
    %v1402 = vsel %vm113, %v1347, 0
    %v1405 = vsel %vm113, %v1348, 0
    %v1408 = vsel %vm113, %v1349, 0
    %v1411 = vsel %vm113, %v1350, 0
    %v1414 = vsel %vm113, %v1351, 0
    %v1417 = vsel %vm113, %v1352, 0
    %v1420 = vsel %vm113, %v1353, 0
    %v1423 = vsel %vm113, %v1354, 0
    %v1426 = vsel %vm113, %v1355, 0
    %v1429 = vsel %vm113, %v1356, 0
    %v1432 = vsel %vm113, %v1357, 0
    %v1435 = vsel %vm113, %v1358, 0
    %v1438 = vsel %vm113, %v1359, 0
    %v1441 = vsel %vm113, %v1376, 0
    %v1444 = vsel %vm113, %v1377, 0
    %v1447 = vsel %vm113, %v1378, 0
    %v1450 = vsel %vm113, %v1379, 0
    %v1453 = vsel %vm113, %v1380, 0
    %v1456 = vsel %vm113, %v1381, 0
    %v1459 = vsel %vm113, %v1382, 0
    %v1462 = vsel %vm113, %v1383, 0
    %v1465 = vsel %vm113, %v1384, 0
    %v1468 = vsel %vm113, %v1385, 0
    %v1471 = vsel %vm113, %v1386, 0
    %v1474 = vsel %vm113, %v1387, 0
    %v1477 = vsel %vm113, %v1388, 0
    %v1480 = vsel %vm113, %v1389, 0
    %v1483 = vsel %vm113, %v1390, 0
    %v1486 = vsel %vm113, %v1391, 0
    %1488 = vmatprep.subr.mxu0 0.0
    %1489 = vmatpush1.msra.mxu0 %v603
    %1490 = vmatprep.subr.mxu0 0.0
    %1491 = vmatpush1.msra.mxu0 0.0
    %1492 = vmatprep.subr.mxu0 0.0
    %1493 = vmatpush1.msra.mxu0 0.0
    %1494 = vmatprep.subr.mxu0 0.0
    %1495 = vmatpush1.msra.mxu0 0.0
    %1496 = vmatprep.subr.mxu0 0.0
    %1497 = vmatpush1.msra.mxu0 0.0
    %1498 = vmatprep.subr.mxu0 0.0
    %1499 = vmatpush1.msra.mxu0 0.0
    %1500 = vmatprep.subr.mxu0 0.0
    %1501 = vmatpush1.msra.mxu0 0.0
    %1502 = vmatprep.subr.mxu0 0.0
    %1503 = vmatpush1.msra.mxu0 0.0
    %1504 = vmatprep.subr.mxu0 0.0
    %1505 = vmatpush1.msra.mxu0 0.0
    %1506 = vmatprep.subr.mxu0 0.0
    %1507 = vmatpush1.msra.mxu0 0.0
    %1508 = vmatprep.subr.mxu0 0.0
    %1509 = vmatpush1.msra.mxu0 0.0
    %1510 = vmatprep.subr.mxu0 0.0
    %1511 = vmatpush1.msra.mxu0 0.0
    %1512 = vmatprep.subr.mxu0 0.0
    %1513 = vmatpush1.msra.mxu0 0.0
    %1514 = vmatprep.subr.mxu0 0.0
    %1515 = vmatpush1.msra.mxu0 0.0
    %1516 = vmatprep.subr.mxu0 0.0
    %1517 = vmatpush1.msra.mxu0 0.0
    %1518 = vmatprep.subr.mxu0 0.0
    %1519 = vmatpush1.msra.mxu0 0.0
    %1520 = vmatprep.subr.mxu0 0.0
    %1521 = vmatpush1.msra.mxu0 0.0
    %1522 = vmatprep.subr.mxu0 0.0
    %1523 = vmatpush1.msra.mxu0 0.0
    %1524 = vmatprep.subr.mxu0 0.0
    %1525 = vmatpush1.msra.mxu0 0.0
    %1526 = vmatprep.subr.mxu0 0.0
    %1527 = vmatpush1.msra.mxu0 0.0
    %1528 = vmatprep.subr.mxu0 0.0
    %1529 = vmatpush1.msra.mxu0 0.0
    %1530 = vmatprep.subr.mxu0 0.0
    %1531 = vmatpush1.msra.mxu0 0.0
    %1532 = vmatprep.subr.mxu0 0.0
    %1533 = vmatpush1.msra.mxu0 0.0
    %1534 = vmatprep.subr.mxu0 0.0
    %1535 = vmatpush1.msra.mxu0 0.0
    %1536 = vmatprep.subr.mxu0 0.0
    %1537 = vmatpush1.msra.mxu0 0.0
    %1538 = vmatprep.subr.mxu0 0.0
    %1539 = vmatpush1.msra.mxu0 0.0
    %1540 = vmatprep.subr.mxu0 0.0
    %1541 = vmatpush1.msra.mxu0 0.0
    %1542 = vmatprep.subr.mxu0 0.0
    %1543 = vmatpush1.msra.mxu0 0.0
    %1544 = vmatprep.subr.mxu0 0.0
    %1545 = vmatpush1.msra.mxu0 0.0
    %1546 = vmatprep.subr.mxu0 0.0
    %1547 = vmatpush1.msra.mxu0 0.0
    %1548 = vmatprep.subr.mxu0 0.0
    %1549 = vmatpush1.msra.mxu0 0.0
    %1550 = vmatprep.subr.mxu0 0.0
    %1551 = vmatpush1.msra.mxu0 0.0
    %1552 = vmatprep.mubr.f32.mxu0 0.0
    %1553 = vmatmul.mubr.f32.gmra.mrb[0].mxu0 %v1393
    %v1554 = vpop.f32.mrb[0].mxu0
    %v1555 = vadd.f32 %v1167, %v1554
    %v1556 = vpop.f32.mrb[0].mxu0
    %1557 = vmatprep.mubr.f32.mxu0 0.0
    %1558 = vmatmul.mubr.f32.gmra.mrb[0].mxu0 %v1396
    %v1559 = vpop.f32.mrb[0].mxu0
    %v1560 = vadd.f32 %v1172, %v1559
    %v1561 = vpop.f32.mrb[0].mxu0
    %1562 = vmatprep.mubr.f32.mxu0 0.0
    %1563 = vmatmul.mubr.f32.gmra.mrb[0].mxu0 %v1399
    %v1564 = vpop.f32.mrb[0].mxu0
    %v1565 = vadd.f32 %v1177, %v1564
    %v1566 = vpop.f32.mrb[0].mxu0
    %1567 = vmatprep.mubr.f32.mxu0 0.0
    %1568 = vmatmul.mubr.f32.gmra.mrb[0].mxu0 %v1402
    %v1569 = vpop.f32.mrb[0].mxu0
    %v1570 = vadd.f32 %v1182, %v1569
    %v1571 = vpop.f32.mrb[0].mxu0
    %1572 = vmatprep.mubr.f32.mxu0 0.0
    %1573 = vmatmul.mubr.f32.gmra.mrb[0].mxu0 %v1405
    %v1574 = vpop.f32.mrb[0].mxu0
    %v1575 = vadd.f32 %v1187, %v1574
    %v1576 = vpop.f32.mrb[0].mxu0
    %1577 = vmatprep.mubr.f32.mxu0 0.0
    %1578 = vmatmul.mubr.f32.gmra.mrb[0].mxu0 %v1408
    %v1579 = vpop.f32.mrb[0].mxu0
    %v1580 = vadd.f32 %v1192, %v1579
    %v1581 = vpop.f32.mrb[0].mxu0
    %1582 = vmatprep.mubr.f32.mxu0 0.0
    %1583 = vmatmul.mubr.f32.gmra.mrb[0].mxu0 %v1411
    %v1584 = vpop.f32.mrb[0].mxu0
    %v1585 = vadd.f32 %v1197, %v1584
    %v1586 = vpop.f32.mrb[0].mxu0
    %1587 = vmatprep.mubr.f32.mxu0 0.0
    %1588 = vmatmul.mubr.f32.gmra.mrb[0].mxu0 %v1414
    %v1589 = vpop.f32.mrb[0].mxu0
    %v1590 = vadd.f32 %v1202, %v1589
    %v1591 = vpop.f32.mrb[0].mxu0
    %1592 = vmatprep.mubr.f32.mxu0 0.0
    %1593 = vmatmul.mubr.f32.gmra.mrb[0].mxu0 %v1417
    %v1594 = vpop.f32.mrb[0].mxu0
    %v1595 = vadd.f32 %v1207, %v1594
    %v1596 = vpop.f32.mrb[0].mxu0
    %1597 = vmatprep.mubr.f32.mxu0 0.0
    %1598 = vmatmul.mubr.f32.gmra.mrb[0].mxu0 %v1420
    %v1599 = vpop.f32.mrb[0].mxu0
    %v1600 = vadd.f32 %v1212, %v1599
    %v1601 = vpop.f32.mrb[0].mxu0
    %1602 = vmatprep.mubr.f32.mxu0 0.0
    %1603 = vmatmul.mubr.f32.gmra.mrb[0].mxu0 %v1423
    %v1604 = vpop.f32.mrb[0].mxu0
    %v1605 = vadd.f32 %v1217, %v1604
    %v1606 = vpop.f32.mrb[0].mxu0
    %1607 = vmatprep.mubr.f32.mxu0 0.0
    %1608 = vmatmul.mubr.f32.gmra.mrb[0].mxu0 %v1426
    %v1609 = vpop.f32.mrb[0].mxu0
    %v1610 = vadd.f32 %v1222, %v1609
    %v1611 = vpop.f32.mrb[0].mxu0
    %1612 = vmatprep.mubr.f32.mxu0 0.0
    %1613 = vmatmul.mubr.f32.gmra.mrb[0].mxu0 %v1429
    %v1614 = vpop.f32.mrb[0].mxu0
    %v1615 = vadd.f32 %v1227, %v1614
    %v1616 = vpop.f32.mrb[0].mxu0
    %1617 = vmatprep.mubr.f32.mxu0 0.0
    %1618 = vmatmul.mubr.f32.gmra.mrb[0].mxu0 %v1432
    %v1619 = vpop.f32.mrb[0].mxu0
    %v1620 = vadd.f32 %v1232, %v1619
    %v1621 = vpop.f32.mrb[0].mxu0
    %1622 = vmatprep.mubr.f32.mxu0 0.0
    %1623 = vmatmul.mubr.f32.gmra.mrb[0].mxu0 %v1435
    %v1624 = vpop.f32.mrb[0].mxu0
    %v1625 = vadd.f32 %v1237, %v1624
    %v1626 = vpop.f32.mrb[0].mxu0
    %1627 = vmatprep.mubr.f32.mxu0 0.0
    %1628 = vmatmul.mubr.f32.gmra.mrb[0].mxu0 %v1438
    %v1629 = vpop.f32.mrb[0].mxu0
    %v1630 = vadd.f32 %v1242, %v1629
    %v1631 = vpop.f32.mrb[0].mxu0
    %1632 = vmatprep.mubr.f32.mxu0 0.0
    %1633 = vmatmul.mubr.f32.gmra.mrb[0].mxu0 %v1441
    %v1634 = vpop.f32.mrb[0].mxu0
    %v1635 = vadd.f32 %v1247, %v1634
    %v1636 = vpop.f32.mrb[0].mxu0
    %1637 = vmatprep.mubr.f32.mxu0 0.0
    %1638 = vmatmul.mubr.f32.gmra.mrb[0].mxu0 %v1444
    %v1639 = vpop.f32.mrb[0].mxu0
    %v1640 = vadd.f32 %v1252, %v1639
    %v1641 = vpop.f32.mrb[0].mxu0
    %1642 = vmatprep.mubr.f32.mxu0 0.0
    %1643 = vmatmul.mubr.f32.gmra.mrb[0].mxu0 %v1447
    %v1644 = vpop.f32.mrb[0].mxu0
    %v1645 = vadd.f32 %v1257, %v1644
    %v1646 = vpop.f32.mrb[0].mxu0
    %1647 = vmatprep.mubr.f32.mxu0 0.0
    %1648 = vmatmul.mubr.f32.gmra.mrb[0].mxu0 %v1450
    %v1649 = vpop.f32.mrb[0].mxu0
    %v1650 = vadd.f32 %v1262, %v1649
    %v1651 = vpop.f32.mrb[0].mxu0
    %1652 = vmatprep.mubr.f32.mxu0 0.0
    %1653 = vmatmul.mubr.f32.gmra.mrb[0].mxu0 %v1453
    %v1654 = vpop.f32.mrb[0].mxu0
    %v1655 = vadd.f32 %v1267, %v1654
    %v1656 = vpop.f32.mrb[0].mxu0
    %1657 = vmatprep.mubr.f32.mxu0 0.0
    %1658 = vmatmul.mubr.f32.gmra.mrb[0].mxu0 %v1456
    %v1659 = vpop.f32.mrb[0].mxu0
    %v1660 = vadd.f32 %v1272, %v1659
    %v1661 = vpop.f32.mrb[0].mxu0
    %1662 = vmatprep.mubr.f32.mxu0 0.0
    %1663 = vmatmul.mubr.f32.gmra.mrb[0].mxu0 %v1459
    %v1664 = vpop.f32.mrb[0].mxu0
    %v1665 = vadd.f32 %v1277, %v1664
    %v1666 = vpop.f32.mrb[0].mxu0
    %1667 = vmatprep.mubr.f32.mxu0 0.0
    %1668 = vmatmul.mubr.f32.gmra.mrb[0].mxu0 %v1462
    %v1669 = vpop.f32.mrb[0].mxu0
    %v1670 = vadd.f32 %v1282, %v1669
    %v1671 = vpop.f32.mrb[0].mxu0
    %1672 = vmatprep.mubr.f32.mxu0 0.0
    %1673 = vmatmul.mubr.f32.gmra.mrb[0].mxu0 %v1465
    %v1674 = vpop.f32.mrb[0].mxu0
    %v1675 = vadd.f32 %v1287, %v1674
    %v1676 = vpop.f32.mrb[0].mxu0
    %1677 = vmatprep.mubr.f32.mxu0 0.0
    %1678 = vmatmul.mubr.f32.gmra.mrb[0].mxu0 %v1468
    %v1679 = vpop.f32.mrb[0].mxu0
    %v1680 = vadd.f32 %v1292, %v1679
    %v1681 = vpop.f32.mrb[0].mxu0
    %1682 = vmatprep.mubr.f32.mxu0 0.0
    %1683 = vmatmul.mubr.f32.gmra.mrb[0].mxu0 %v1471
    %v1684 = vpop.f32.mrb[0].mxu0
    %v1685 = vadd.f32 %v1297, %v1684
    %v1686 = vpop.f32.mrb[0].mxu0
    %1687 = vmatprep.mubr.f32.mxu0 0.0
    %1688 = vmatmul.mubr.f32.gmra.mrb[0].mxu0 %v1474
    %v1689 = vpop.f32.mrb[0].mxu0
    %v1690 = vadd.f32 %v1302, %v1689
    %v1691 = vpop.f32.mrb[0].mxu0
    %1692 = vmatprep.mubr.f32.mxu0 0.0
    %1693 = vmatmul.mubr.f32.gmra.mrb[0].mxu0 %v1477
    %v1694 = vpop.f32.mrb[0].mxu0
    %v1695 = vadd.f32 %v1307, %v1694
    %v1696 = vpop.f32.mrb[0].mxu0
    %1697 = vmatprep.mubr.f32.mxu0 0.0
    %1698 = vmatmul.mubr.f32.gmra.mrb[0].mxu0 %v1480
    %v1699 = vpop.f32.mrb[0].mxu0
    %v1700 = vadd.f32 %v1312, %v1699
    %v1701 = vpop.f32.mrb[0].mxu0
    %1702 = vmatprep.mubr.f32.mxu0 0.0
    %1703 = vmatmul.mubr.f32.gmra.mrb[0].mxu0 %v1483
    %v1704 = vpop.f32.mrb[0].mxu0
    %v1705 = vadd.f32 %v1317, %v1704
    %v1706 = vpop.f32.mrb[0].mxu0
    %1707 = vmatprep.mubr.f32.mxu0 0.0
    %1708 = vmatmul.mubr.f32.gmra.mrb[0].mxu0 %v1486
    %v1709 = vpop.f32.mrb[0].mxu0
    %v1710 = vadd.f32 %v1322, %v1709
    %v1711 = vpop.f32.mrb[0].mxu0
    %1712 = vdwg.mxu0
    %v1713 = vmax.f32 %v1555, 0.0
    %v1714 = vmax.f32 %v1560, 0.0
    %v1715 = vmax.f32 %v1565, 0.0
    %v1716 = vmax.f32 %v1570, 0.0
    %v1717 = vmax.f32 %v1575, 0.0
    %v1718 = vmax.f32 %v1580, 0.0
    %v1719 = vmax.f32 %v1585, 0.0
    %v1720 = vmax.f32 %v1590, 0.0
    %v1721 = vmax.f32 %v1595, 0.0
    %v1722 = vmax.f32 %v1600, 0.0
    %v1723 = vmax.f32 %v1605, 0.0
    %v1724 = vmax.f32 %v1610, 0.0
    %v1725 = vmax.f32 %v1615, 0.0
    %v1726 = vmax.f32 %v1620, 0.0
    %v1727 = vmax.f32 %v1625, 0.0
    %v1728 = vmax.f32 %v1630, 0.0
    %v1729 = vmax.f32 %v1635, 0.0
    %v1730 = vmax.f32 %v1640, 0.0
    %v1731 = vmax.f32 %v1645, 0.0
    %v1732 = vmax.f32 %v1650, 0.0
    %v1733 = vmax.f32 %v1655, 0.0
    %v1734 = vmax.f32 %v1660, 0.0
    %v1735 = vmax.f32 %v1665, 0.0
    %v1736 = vmax.f32 %v1670, 0.0
    %v1737 = vmax.f32 %v1675, 0.0
    %v1738 = vmax.f32 %v1680, 0.0
    %v1739 = vmax.f32 %v1685, 0.0
    %v1740 = vmax.f32 %v1690, 0.0
    %v1741 = vmax.f32 %v1695, 0.0
    %v1742 = vmax.f32 %v1700, 0.0
    %v1743 = vmax.f32 %v1705, 0.0
    %v1744 = vmax.f32 %v1710, 0.0
    %1745 = vmatprep.subr.mxu0 0.0
    %1746 = vmatpush1.msra.mxu0 %v1713
    %1747 = vmatprep.subr.mxu0 0.0
    %1748 = vmatpush1.msra.mxu0 %v1714
    %1749 = vmatprep.subr.mxu0 0.0
    %1750 = vmatpush1.msra.mxu0 %v1715
    %1751 = vmatprep.subr.mxu0 0.0
    %1752 = vmatpush1.msra.mxu0 %v1716
    %1753 = vmatprep.subr.mxu0 0.0
    %1754 = vmatpush1.msra.mxu0 %v1717
    %1755 = vmatprep.subr.mxu0 0.0
    %1756 = vmatpush1.msra.mxu0 %v1718
    %1757 = vmatprep.subr.mxu0 0.0
    %1758 = vmatpush1.msra.mxu0 %v1719
    %1759 = vmatprep.subr.mxu0 0.0
    %1760 = vmatpush1.msra.mxu0 %v1720
    %1761 = vmatprep.subr.mxu0 0.0
    %1762 = vmatpush1.msra.mxu0 %v1721
    %1763 = vmatprep.subr.mxu0 0.0
    %1764 = vmatpush1.msra.mxu0 %v1722
    %1765 = vmatprep.subr.mxu0 0.0
    %1766 = vmatpush1.msra.mxu0 %v1723
    %1767 = vmatprep.subr.mxu0 0.0
    %1768 = vmatpush1.msra.mxu0 %v1724
    %1769 = vmatprep.subr.mxu0 0.0
    %1770 = vmatpush1.msra.mxu0 %v1725
    %1771 = vmatprep.subr.mxu0 0.0
    %1772 = vmatpush1.msra.mxu0 %v1726
    %1773 = vmatprep.subr.mxu0 0.0
    %1774 = vmatpush1.msra.mxu0 %v1727
    %1775 = vmatprep.subr.mxu0 0.0
    %1776 = vmatpush1.msra.mxu0 %v1728
    %1777 = vmatprep.subr.mxu0 0.0
    %1778 = vmatpush1.msra.mxu0 %v1729
    %1779 = vmatprep.subr.mxu0 0.0
    %1780 = vmatpush1.msra.mxu0 %v1730
    %1781 = vmatprep.subr.mxu0 0.0
    %1782 = vmatpush1.msra.mxu0 %v1731
    %1783 = vmatprep.subr.mxu0 0.0
    %1784 = vmatpush1.msra.mxu0 %v1732
    %1785 = vmatprep.subr.mxu0 0.0
    %1786 = vmatpush1.msra.mxu0 %v1733
    %1787 = vmatprep.subr.mxu0 0.0
    %1788 = vmatpush1.msra.mxu0 %v1734
    %1789 = vmatprep.subr.mxu0 0.0
    %1790 = vmatpush1.msra.mxu0 %v1735
    %1791 = vmatprep.subr.mxu0 0.0
    %1792 = vmatpush1.msra.mxu0 %v1736
    %1793 = vmatprep.subr.mxu0 0.0
    %1794 = vmatpush1.msra.mxu0 %v1737
    %1795 = vmatprep.subr.mxu0 0.0
    %1796 = vmatpush1.msra.mxu0 %v1738
    %1797 = vmatprep.subr.mxu0 0.0
    %1798 = vmatpush1.msra.mxu0 %v1739
    %1799 = vmatprep.subr.mxu0 0.0
    %1800 = vmatpush1.msra.mxu0 %v1740
    %1801 = vmatprep.subr.mxu0 0.0
    %1802 = vmatpush1.msra.mxu0 %v1741
    %1803 = vmatprep.subr.mxu0 0.0
    %1804 = vmatpush1.msra.mxu0 %v1742
    %1805 = vmatprep.subr.mxu0 0.0
    %1806 = vmatpush1.msra.mxu0 %v1743
    %1807 = vmatprep.subr.mxu0 0.0
    %1808 = vmatpush1.msra.mxu0 %v1744
    %1809 = vmatprep.mubr.f32.mxu0 1.0
    %1810 = vmatmul.mubr.f32.gmra.mrb[0].mxu0 1.0
    %v1811 = vpop.f32.mrb[0].mxu0
    %v1812 = vadd.f32 0.0, %v1811
    %v1813 = vpop.f32.mrb[0].mxu0
    %1814 = vdwg.mxu0
    %v1815 = vld [vmem:[#allocation2] sm:$0x3]
    %v1817 = vrot.slane %v1812, 7
    %vm1819 = vcmask 1040384
    %v1820 = vsel %vm1819, %v929, %v1817
    %v1821 = vadd.f32 %v1815, %v1820
    %1822 = vst [vmem:[#allocation2] sm:$0x3] %v1821
    // Predicated region
    $region30: #{tpu_custom_call.1} parent=1 // pred_check
      %p1823 = pneg %p35
    $region31: #{tpu_custom_call.1} parent=1 // pred_check_branch
      %1825 = sbr.rel (%p1823) target = $region33
    $region32: #{tpu_custom_call.1} parent=1 // pred_region
      %v1826 = vld [vmem:[#allocation2] sm:$0x3]
      %v1827 = vmul.f32 %v1826, 0.00390625
      %v1828 = vld [vmem:[#allocation3] sm:$0xff]
      %v1829 = vld [vmem:[#allocation3 + $0x8] sm:$0xff]
      %v1830 = vld [vmem:[#allocation3 + $0x10] sm:$0xff]
      %v1831 = vld [vmem:[#allocation3 + $0x18] sm:$0xff]
      %v1832 = vld [vmem:[#allocation3 + $0x20] sm:$0xff]
      %v1833 = vld [vmem:[#allocation3 + $0x28] sm:$0xff]
      %v1834 = vld [vmem:[#allocation3 + $0x30] sm:$0xff]
      %v1835 = vld [vmem:[#allocation3 + $0x38] sm:$0xff]
      %v1836 = vld [vmem:[#allocation3 + $0x40] sm:$0xff]
      %v1837 = vld [vmem:[#allocation3 + $0x48] sm:$0xff]
      %v1838 = vld [vmem:[#allocation3 + $0x50] sm:$0xff]
      %v1839 = vld [vmem:[#allocation3 + $0x58] sm:$0xff]
      %v1840 = vld [vmem:[#allocation3 + $0x60] sm:$0xff]
      %v1841 = vld [vmem:[#allocation3 + $0x68] sm:$0xff]
      %v1842 = vld [vmem:[#allocation3 + $0x70] sm:$0xff]
      %v1843 = vld [vmem:[#allocation3 + $0x78] sm:$0xff]
      %v1844 = vld [vmem:[%s4] sm:$0x1]
      %v1846 = vlaneseq
      %v1847 = vshrl.u32 %v1846, 7
      %v1848 = vsub.s32 0, %v1847
      %v1849 = vrot.slane %v1844, %v1848
      %1851 = vmatprep.subr.mxu0 0.0
      %1852 = vmatpush1.msra.mxu0 %v1828
      %1853 = vmatprep.subr.mxu0 0.0
      %1854 = vmatpush1.msra.mxu0 %v1829
      %1855 = vmatprep.subr.mxu0 0.0
      %1856 = vmatpush1.msra.mxu0 %v1830
      %1857 = vmatprep.subr.mxu0 0.0
      %1858 = vmatpush1.msra.mxu0 %v1831
      %1859 = vmatprep.subr.mxu0 0.0
      %1860 = vmatpush1.msra.mxu0 %v1832
      %1861 = vmatprep.subr.mxu0 0.0
      %1862 = vmatpush1.msra.mxu0 %v1833
      %1863 = vmatprep.subr.mxu0 0.0
      %1864 = vmatpush1.msra.mxu0 %v1834
      %1865 = vmatprep.subr.mxu0 0.0
      %1866 = vmatpush1.msra.mxu0 %v1835
      %1867 = vmatprep.subr.mxu0 0.0
      %1868 = vmatpush1.msra.mxu0 %v1836
      %1869 = vmatprep.subr.mxu0 0.0
      %1870 = vmatpush1.msra.mxu0 %v1837
      %1871 = vmatprep.subr.mxu0 0.0
      %1872 = vmatpush1.msra.mxu0 %v1838
      %1873 = vmatprep.subr.mxu0 0.0
      %1874 = vmatpush1.msra.mxu0 %v1839
      %1875 = vmatprep.subr.mxu0 0.0
      %1876 = vmatpush1.msra.mxu0 %v1840
      %1877 = vmatprep.subr.mxu0 0.0
      %1878 = vmatpush1.msra.mxu0 %v1841
      %1879 = vmatprep.subr.mxu0 0.0
      %1880 = vmatpush1.msra.mxu0 %v1842
      %1881 = vmatprep.subr.mxu0 0.0
      %1882 = vmatpush1.msra.mxu0 %v1843
      %1883 = vmatprep.subr.mxu0 0.0
      %1884 = vmatpush1.msra.mxu0 0.0
      %1885 = vmatprep.subr.mxu0 0.0
      %1886 = vmatpush1.msra.mxu0 0.0
      %1887 = vmatprep.subr.mxu0 0.0
      %1888 = vmatpush1.msra.mxu0 0.0
      %1889 = vmatprep.subr.mxu0 0.0
      %1890 = vmatpush1.msra.mxu0 0.0
      %1891 = vmatprep.subr.mxu0 0.0
      %1892 = vmatpush1.msra.mxu0 0.0
      %1893 = vmatprep.subr.mxu0 0.0
      %1894 = vmatpush1.msra.mxu0 0.0
      %1895 = vmatprep.subr.mxu0 0.0
      %1896 = vmatpush1.msra.mxu0 0.0
      %1897 = vmatprep.subr.mxu0 0.0
      %1898 = vmatpush1.msra.mxu0 0.0
      %1899 = vmatprep.subr.mxu0 0.0
      %1900 = vmatpush1.msra.mxu0 0.0
      %1901 = vmatprep.subr.mxu0 0.0
      %1902 = vmatpush1.msra.mxu0 0.0
      %1903 = vmatprep.subr.mxu0 0.0
      %1904 = vmatpush1.msra.mxu0 0.0
      %1905 = vmatprep.subr.mxu0 0.0
      %1906 = vmatpush1.msra.mxu0 0.0
      %1907 = vmatprep.subr.mxu0 0.0
      %1908 = vmatpush1.msra.mxu0 0.0
      %1909 = vmatprep.subr.mxu0 0.0
      %1910 = vmatpush1.msra.mxu0 0.0
      %1911 = vmatprep.subr.mxu0 0.0
      %1912 = vmatpush1.msra.mxu0 0.0
      %1913 = vmatprep.subr.mxu0 0.0
      %1914 = vmatpush1.msra.mxu0 0.0
      %1915 = vmatprep.mubr.f32.mxu0 0.0
      %1916 = vmatmul.mubr.f32.gmra.mrb[0].mxu0 %v1827
      %v1917 = vpop.f32.mrb[0].mxu0
      %v1918 = vadd.f32 %v1849, %v1917
      %v1919 = vpop.f32.mrb[0].mxu0
      %1920 = vdwg.mxu0
      %1921 = vst [vmem:[#allocation6] sm:$0x3] %v1918
    $region33: #{tpu_custom_call.1} parent=1 // pred_fallthru
      _
    // Predicated region
    $region34: #{tpu_custom_call.1} parent=1 // pred_check
      _
    $region35: #{tpu_custom_call.1} parent=1 // pred_check_branch
      %1923 = sbr.rel (0) target = $region37
    $region36: #{tpu_custom_call.1} parent=1 // pred_region
      %s1925 = ssub.s32 32, 32
      %1926 = vsyncadd [#allocation5], %s1925
      %s1928 = sshll.u32 [#allocation6], 4
      %s1929 = int_to_ptr.vmem [resolvable:$true] %s1928
      %1931 = dma.vmem_to_hbm [thread:$0]  %s1929, 32, %s5, [#allocation5]
    $region37: #{tpu_custom_call.1} parent=1 // pred_fallthru
      _
    // Predicated region
    $region38: #{tpu_custom_call.1} parent=1 // pred_check
      _
    $region39: #{tpu_custom_call.1} parent=1 // pred_check_branch
      %1933 = sbr.rel (0) target = $region41
    $region40: #{tpu_custom_call.1} parent=1 // pred_region
      %1934 = dma.done [#allocation5], 32
    $region41: #{tpu_custom_call.1} parent=1 // pred_fallthru
      _
    %1935 = vsyncpa [#allocation4], 1
    %1936 = vsyncpa [#allocation5], 1

</llo_original>
